<compile_context>
chip_gen: v6e
topology: v6e:2x2x1
jax: 0.10.0
libtpu: 0.0.40
codegen_flags: <defaults>
</compile_context>

<pallas_src>
import functools
import math

import jax
import jax.numpy as jnp
from jax import lax
from jax.experimental import pallas as pl
from jax.experimental.pallas import tpu as pltpu


def _encoder_stack_kernel(nhead, seq_len,
                          x_ref,                      # (Bt*S, E)  f32
                          wqkv_ref, bqkv_ref,         # (E, 3E) bf16, (1, 3E) f32
                          wo_ref, bo_ref,             # (H, hd, E) bf16, (1, E) f32
                          w1_ref, b1_ref,             # (E, F) bf16, (1, F) f32
                          w2_ref, b2_ref,             # (F, E) bf16, (1, E) f32
                          g1_ref, be1_ref,            # (1, E), (1, E) f32
                          g2_ref, be2_ref,            # (1, E), (1, E) f32
                          out_ref,                    # (Bt*S, E) f32 (resident over layers)
                          ent_ref):                   # (Bt, S)   f32 (per layer)
    N, E = out_ref.shape                              # N = Bt * S
    S = seq_len
    Bt = N // S
    H = nhead
    hd = E // H
    eps = 1e-5

    # First layer of this batch tile: seed the VMEM-resident activation block.
    @pl.when(pl.program_id(1) == 0)
    def _():
        out_ref[...] = x_ref[...]

    x = out_ref[...]                                  # (N, E) f32, layer input
    xb = x.astype(jnp.bfloat16)

    # ---- fused QKV projection (bf16 MXU, f32 accumulate) -------------------
    # 1/sqrt(hd) is already folded into the Q rows of wqkv / bqkv.
    qkv = jnp.dot(xb, wqkv_ref[...], preferred_element_type=jnp.float32)
    qkv = qkv + bqkv_ref[...]                         # (N, 3E) f32
    q3 = qkv[:, :E].reshape(Bt, S, E)
    k3 = qkv[:, E:2 * E].reshape(Bt, S, E)
    v3 = qkv[:, 2 * E:].reshape(Bt, S, E)

    # ---- multi-head attention ----------------------------------------------
    # Short static loop over heads; each head is batched over the batch tile
    # with leading-batch 3-D einsums.  The head concat is folded into the
    # output projection as  sum_h (ao_h @ Wo_h)  ==  concat_h(ao_h) @ Wo.
    p_sum = jnp.zeros((Bt, S, S), jnp.float32)
    mha = jnp.zeros((N, E), jnp.float32)
    for h in range(H):
        lo = h * hd
        qh = q3[:, :, lo:lo + hd].astype(jnp.bfloat16)          # (Bt, S, hd)
        kh = k3[:, :, lo:lo + hd].astype(jnp.bfloat16)
        vh = v3[:, :, lo:lo + hd].astype(jnp.bfloat16)

        sc = jnp.einsum('bsd,btd->bst', qh, kh,
                        preferred_element_type=jnp.float32)      # (Bt, S, S)
        sc = sc - jnp.max(sc, axis=-1, keepdims=True)
        e = jnp.exp(sc)
        p = e * pl.reciprocal(jnp.sum(e, axis=-1, keepdims=True), approx=True)
        p_sum = p_sum + p

        ao = jnp.einsum('bst,btd->bsd', p.astype(jnp.bfloat16), vh,
                        preferred_element_type=jnp.float32)      # (Bt, S, hd)
        mha = mha + jnp.dot(ao.reshape(N, hd).astype(jnp.bfloat16),
                            wo_ref[h],
                            preferred_element_type=jnp.float32)  # (N, E)

    # head-averaged attention weights -> entropy (PyTorch MHA convention),
    # one lane-dense full-block store.  Clamp inside the log so the masked
    # branch never produces -inf/NaN.
    p_avg = p_sum * (1.0 / H)                                    # (Bt, S, S)
    logp = jnp.log(jnp.maximum(p_avg, 1e-30))
    ent_ref[...] = -jnp.sum(jnp.where(p_avg > 0, p_avg * logp, 0.0), axis=-1)

    mha = mha + bo_ref[...]

    # ---- residual + LayerNorm1 (f32 VPU math) -------------------------------
    src = x + mha                                     # dropout (eval) == identity
    mu = jnp.mean(src, axis=-1, keepdims=True)
    var = jnp.mean(jnp.square(src - mu), axis=-1, keepdims=True)
    src = (src - mu) * lax.rsqrt(var + eps) * g1_ref[...] + be1_ref[...]

    # ---- ReLU FFN + residual + LayerNorm2 -----------------------------------
    h1 = jnp.dot(src.astype(jnp.bfloat16), w1_ref[...],
                 preferred_element_type=jnp.float32) + b1_ref[...]
    h1 = jnp.maximum(h1, 0.0)
    ffn = jnp.dot(h1.astype(jnp.bfloat16), w2_ref[...],
                  preferred_element_type=jnp.float32) + b2_ref[...]
    src2 = src + ffn
    mu2 = jnp.mean(src2, axis=-1, keepdims=True)
    var2 = jnp.mean(jnp.square(src2 - mu2), axis=-1, keepdims=True)
    out_ref[...] = ((src2 - mu2) * lax.rsqrt(var2 + eps)
                    * g2_ref[...] + be2_ref[...]).astype(out_ref.dtype)


def transformer_encoder(src, params, nhead, *, batch_tile=1):
    """Mirrors TransformerEncoder.forward (mask=None, norm=None).

    src: (S, B, E) f32.  params: stacked kernel-ready params from
    prepare_params().  Returns (output (S,B,E), entropy (B,S))."""
    S, B, E = src.shape
    L = params["wqkv"].shape[0]
    F = params["w1"].shape[-1]
    H = nhead
    hd = E // H
    assert E % H == 0 and B % batch_tile == 0
    Bt = batch_tile
    nbt = B // Bt
    N = Bt * S

    # Layout plumbing in the wrapper: (S, B, E) -> (batch_tiles, Bt*S, E),
    # rows ordered (b, s) so a batch tile is a contiguous lane-dense slab.
    x = jnp.transpose(src, (1, 0, 2)).reshape(nbt, N, E)

    kernel = functools.partial(_encoder_stack_kernel, nhead, S)

    xmap = lambda bi, l: (bi, 0, 0)         # activations: follow the batch tile
    lmap3 = lambda bi, l: (l, 0, 0)         # per-layer params (rank 3)
    lmap4 = lambda bi, l: (l, 0, 0, 0)      # per-layer params (rank 4)

    in_specs = [
        pl.BlockSpec((None, N, E), xmap),              # x (f32)
        pl.BlockSpec((None, E, 3 * E), lmap3),         # wqkv (bf16)
        pl.BlockSpec((None, 1, 3 * E), lmap3),         # bqkv
        pl.BlockSpec((None, H, hd, E), lmap4),         # wo (bf16, pre-split per head)
        pl.BlockSpec((None, 1, E), lmap3),             # bo
        pl.BlockSpec((None, E, F), lmap3),             # w1 (bf16)
        pl.BlockSpec((None, 1, F), lmap3),             # b1
        pl.BlockSpec((None, F, E), lmap3),             # w2 (bf16)
        pl.BlockSpec((None, 1, E), lmap3),             # b2
        pl.BlockSpec((None, 1, E), lmap3),             # g1
        pl.BlockSpec((None, 1, E), lmap3),             # be1
        pl.BlockSpec((None, 1, E), lmap3),             # g2
        pl.BlockSpec((None, 1, E), lmap3),             # be2
    ]
    out_specs = (
        # activation block: constant index over the layer axis -> stays
        # resident in VMEM across all layers of this batch tile.
        pl.BlockSpec((None, N, E), xmap),
        # per-layer head-averaged attention-weight entropy.
        pl.BlockSpec((None, None, Bt, S), lambda bi, l: (l, bi, 0, 0)),
    )
    out_shape = (
        jax.ShapeDtypeStruct((nbt, N, E), jnp.float32),
        jax.ShapeDtypeStruct((L, nbt, Bt, S), jnp.float32),
    )

    out, ent = pl.pallas_call(
        kernel,
        grid=(nbt, L),
        in_specs=in_specs,
        out_specs=out_specs,
        out_shape=out_shape,
        compiler_params=pltpu.CompilerParams(
            dimension_semantics=("parallel", "arbitrary"),
            vmem_limit_bytes=48 * 1024 * 1024),
    )(x,
      params["wqkv"], params["bqkv"],
      params["wo"], params["bo"],
      params["w1"], params["b1"],
      params["w2"], params["b2"],
      params["g1"], params["be1"],
      params["g2"], params["be2"])

    out = out.reshape(B, S, E).transpose(1, 0, 2)      # back to (S, B, E)
    ent = ent.reshape(L, B, S).mean(axis=0)            # mean over layers -> (B, S)
    return out, ent


def _xavier_uniform(key, shape):
    fan_out, fan_in = shape
    limit = math.sqrt(6.0 / (fan_in + fan_out))
    return jax.random.uniform(key, shape, jnp.float32, -limit, limit)


def init_layer_params(key, d_model, dim_ff):
    """Deterministic synthetic weights in PyTorch TransformerEncoderLayer layout."""
    k0, k1, k2, k3 = jax.random.split(key, 4)
    E, F = d_model, dim_ff
    return dict(
        wqkv=_xavier_uniform(k0, (3 * E, E)),   # in_proj_weight (3E, E)
        bqkv=jnp.zeros((3 * E,), jnp.float32),
        wo=_xavier_uniform(k1, (E, E)),         # out_proj.weight (E, E)
        bo=jnp.zeros((E,), jnp.float32),
        w1=_xavier_uniform(k2, (F, E)),         # linear1.weight (F, E)
        b1=jnp.zeros((F,), jnp.float32),
        w2=_xavier_uniform(k3, (E, F)),         # linear2.weight (E, F)
        b2=jnp.zeros((E,), jnp.float32),
        g1=jnp.ones((E,), jnp.float32),
        be1=jnp.zeros((E,), jnp.float32),
        g2=jnp.ones((E,), jnp.float32),
        be2=jnp.zeros((E,), jnp.float32),
    )


def prepare_params(layer_params, nhead):
    """Stack per-layer PyTorch-layout weights into kernel-ready arrays.

    - weight matrices pre-transposed (input-dim first) so the kernel does x@W,
    - 1/sqrt(head_dim) folded into the Q rows of in_proj (weight and bias),
    - out_proj weight pre-split per head as (H, hd, E),
    - MXU weight operands stored bf16; biases / LayerNorm params kept f32.
    """
    E = layer_params[0]["wo"].shape[0]
    H = nhead
    hd = E // H
    scaling = float(hd) ** -0.5

    def one(p):
        wqkv = p["wqkv"].at[:E].multiply(scaling)      # fold scale into Q rows
        bqkv = p["bqkv"].at[:E].multiply(scaling)
        return dict(
            wqkv=wqkv.T.astype(jnp.bfloat16),                      # (E, 3E)
            bqkv=bqkv.reshape(1, 3 * E),
            wo=p["wo"].T.reshape(H, hd, E).astype(jnp.bfloat16),   # (H, hd, E)
            bo=p["bo"].reshape(1, E),
            w1=p["w1"].T.astype(jnp.bfloat16),                     # (E, F)
            b1=p["b1"].reshape(1, -1),
            w2=p["w2"].T.astype(jnp.bfloat16),                     # (F, E)
            b2=p["b2"].reshape(1, E),
            g1=p["g1"].reshape(1, E), be1=p["be1"].reshape(1, E),
            g2=p["g2"].reshape(1, E), be2=p["be2"].reshape(1, E),
        )

    per_layer = [one(p) for p in layer_params]
    return {k: jnp.stack([d[k] for d in per_layer], axis=0)
            for k in per_layer[0]}


if __name__ == "__main__":
    S, B, E = 8, 2, 32          # seq, batch, d_model
    NHEAD = 4
    DIM_FF = 64
    NUM_LAYERS = 2

    root = jax.random.PRNGKey(0)
    k_src, k_l0, k_l1 = jax.random.split(root, 3)
    src = jax.random.normal(k_src, (S, B, E), jnp.float32)
    raw_layers = [init_layer_params(k, E, DIM_FF) for k in (k_l0, k_l1)]
    params = prepare_params(raw_layers, NHEAD)

    out, ent = transformer_encoder(src, params, NHEAD, batch_tile=1)
    out = jax.block_until_ready(out)
    ent = jax.block_until_ready(ent)

    assert out.shape == (S, B, E), out.shape
    assert ent.shape == (B, S), ent.shape
    assert bool(jnp.all(jnp.isfinite(out))) and bool(jnp.all(jnp.isfinite(ent)))
    print("KERNEL_OK")
</pallas_src>

<mosaic_0001>
module attributes {stable_mosaic.version = 11 : i64} {
  func.func @_encoder_stack_kernel(%arg0: i32, %arg1: i32, %arg2: memref<1x8x32xf32, #tpu.memory_space<vmem>>, %arg3: memref<1x32x96xbf16, #tpu.memory_space<vmem>>, %arg4: memref<1x1x96xf32, #tpu.memory_space<vmem>>, %arg5: memref<1x4x8x32xbf16, #tpu.memory_space<vmem>>, %arg6: memref<1x1x32xf32, #tpu.memory_space<vmem>>, %arg7: memref<1x32x64xbf16, #tpu.memory_space<vmem>>, %arg8: memref<1x1x64xf32, #tpu.memory_space<vmem>>, %arg9: memref<1x64x32xbf16, #tpu.memory_space<vmem>>, %arg10: memref<1x1x32xf32, #tpu.memory_space<vmem>>, %arg11: memref<1x1x32xf32, #tpu.memory_space<vmem>>, %arg12: memref<1x1x32xf32, #tpu.memory_space<vmem>>, %arg13: memref<1x1x32xf32, #tpu.memory_space<vmem>>, %arg14: memref<1x1x32xf32, #tpu.memory_space<vmem>>, %arg15: memref<1x8x32xf32, #tpu.memory_space<vmem>>, %arg16: memref<1x1x1x8xf32, #tpu.memory_space<vmem>>) attributes {dimension_semantics = [#tpu.dimension_semantics<parallel>, #tpu.dimension_semantics<arbitrary>], iteration_bounds = array<i64: 2, 2>, scalar_prefetch = 0 : i64, scratch_operands = 0 : i64, tpu.core_type = #tpu.core_type<tc>, window_params = [{transform_indices = @transform_0, window_bounds = array<i64: 1, 8, 32>}, {transform_indices = @transform_1, window_bounds = array<i64: 1, 32, 96>}, {transform_indices = @transform_2, window_bounds = array<i64: 1, 1, 96>}, {transform_indices = @transform_3, window_bounds = array<i64: 1, 4, 8, 32>}, {transform_indices = @transform_4, window_bounds = array<i64: 1, 1, 32>}, {transform_indices = @transform_5, window_bounds = array<i64: 1, 32, 64>}, {transform_indices = @transform_6, window_bounds = array<i64: 1, 1, 64>}, {transform_indices = @transform_7, window_bounds = array<i64: 1, 64, 32>}, {transform_indices = @transform_8, window_bounds = array<i64: 1, 1, 32>}, {transform_indices = @transform_9, window_bounds = array<i64: 1, 1, 32>}, {transform_indices = @transform_10, window_bounds = array<i64: 1, 1, 32>}, {transform_indices = @transform_11, window_bounds = array<i64: 1, 1, 32>}, {transform_indices = @transform_12, window_bounds = array<i64: 1, 1, 32>}, {transform_indices = @transform_13, window_bounds = array<i64: 1, 8, 32>}, {transform_indices = @transform_14, window_bounds = array<i64: 1, 1, 1, 8>}]} {
    %c0_i32 = arith.constant 0 : i32
    %0 = arith.cmpi eq, %arg1, %c0_i32 : i32
    %1 = arith.extui %0 : i1 to i32
    %c0_i32_0 = arith.constant 0 : i32
    %2 = arith.cmpi ne, %1, %c0_i32_0 : i32
    scf.if %2 {
      %c0_97 = arith.constant 0 : index
      %c0_98 = arith.constant 0 : index
      %c0_99 = arith.constant 0 : index
      %220 = vector.load %arg2[%c0_97, %c0_98, %c0_99] : memref<1x8x32xf32, #tpu.memory_space<vmem>>, vector<1x8x32xf32>
      %221 = vector.shape_cast %220 : vector<1x8x32xf32> to vector<8x32xf32>
      %c0_100 = arith.constant 0 : index
      %c0_101 = arith.constant 0 : index
      %c0_102 = arith.constant 0 : index
      %222 = vector.load %arg15[%c0_100, %c0_101, %c0_102] : memref<1x8x32xf32, #tpu.memory_space<vmem>>, vector<1x8x32xf32>
      %223 = vector.shape_cast %222 : vector<1x8x32xf32> to vector<8x32xf32>
      %224 = vector.shape_cast %221 : vector<8x32xf32> to vector<1x8x32xf32>
      tpu.vector_store %arg15[%c0_100, %c0_101, %c0_102], %224 {strides = array<i32>} : memref<1x8x32xf32, #tpu.memory_space<vmem>>, vector<1x8x32xf32>,
    } else {
    }
    %c0 = arith.constant 0 : index
    %c0_1 = arith.constant 0 : index
    %c0_2 = arith.constant 0 : index
    %3 = vector.load %arg15[%c0, %c0_1, %c0_2] : memref<1x8x32xf32, #tpu.memory_space<vmem>>, vector<1x8x32xf32>
    %4 = vector.shape_cast %3 : vector<1x8x32xf32> to vector<8x32xf32>
    %5 = arith.truncf %4 : vector<8x32xf32> to vector<8x32xbf16>
    %c0_3 = arith.constant 0 : index
    %c0_4 = arith.constant 0 : index
    %c0_5 = arith.constant 0 : index
    %6 = vector.load %arg3[%c0_3, %c0_4, %c0_5] : memref<1x32x96xbf16, #tpu.memory_space<vmem>>, vector<1x32x96xbf16>
    %7 = vector.shape_cast %6 : vector<1x32x96xbf16> to vector<32x96xbf16>
    %cst = arith.constant dense<0.000000e+00> : vector<8x96xf32>
    %8 = tpu.matmul %5, %7, %cst {dimension_numbers = #tpu.dot_dimension_numbers<[1], [0], [0], [1], [0, 0, 1, 1], [], []>} : vector<8x32xbf16>, vector<32x96xbf16>, vector<8x96xf32> -> vector<8x96xf32>
    %c0_6 = arith.constant 0 : index
    %c0_7 = arith.constant 0 : index
    %c0_8 = arith.constant 0 : index
    %9 = vector.load %arg4[%c0_6, %c0_7, %c0_8] : memref<1x1x96xf32, #tpu.memory_space<vmem>>, vector<1x1x96xf32>
    %10 = vector.shape_cast %9 : vector<1x1x96xf32> to vector<1x96xf32>
    %11 = vector.broadcast %10 : vector<1x96xf32> to vector<8x96xf32>
    %12 = arith.addf %8, %11 : vector<8x96xf32>
    %13 = vector.extract_strided_slice %12 {offsets = [0, 0], sizes = [8, 32], strides = [1, 1]} : vector<8x96xf32> to vector<8x32xf32>
    %14 = vector.shape_cast %13 : vector<8x32xf32> to vector<1x8x32xf32>
    %15 = vector.extract_strided_slice %12 {offsets = [0, 32], sizes = [8, 32], strides = [1, 1]} : vector<8x96xf32> to vector<8x32xf32>
    %16 = vector.shape_cast %15 : vector<8x32xf32> to vector<1x8x32xf32>
    %17 = vector.extract_strided_slice %12 {offsets = [0, 64], sizes = [8, 32], strides = [1, 1]} : vector<8x96xf32> to vector<8x32xf32>
    %18 = vector.shape_cast %17 : vector<8x32xf32> to vector<1x8x32xf32>
    %cst_9 = arith.constant 0.000000e+00 : f32
    %19 = vector.broadcast %cst_9 : f32 to vector<1x8x8xf32>
    %cst_10 = arith.constant 0.000000e+00 : f32
    %20 = vector.broadcast %cst_10 : f32 to vector<8x32xf32>
    %21 = vector.extract_strided_slice %14 {offsets = [0, 0, 0], sizes = [1, 8, 8], strides = [1, 1, 1]} : vector<1x8x32xf32> to vector<1x8x8xf32>
    %22 = arith.truncf %21 : vector<1x8x8xf32> to vector<1x8x8xbf16>
    %23 = vector.extract_strided_slice %16 {offsets = [0, 0, 0], sizes = [1, 8, 8], strides = [1, 1, 1]} : vector<1x8x32xf32> to vector<1x8x8xf32>
    %24 = arith.truncf %23 : vector<1x8x8xf32> to vector<1x8x8xbf16>
    %25 = vector.extract_strided_slice %18 {offsets = [0, 0, 0], sizes = [1, 8, 8], strides = [1, 1, 1]} : vector<1x8x32xf32> to vector<1x8x8xf32>
    %26 = arith.truncf %25 : vector<1x8x8xf32> to vector<1x8x8xbf16>
    "tpu.trace_start"() <{level = 10 : i32, message = "bsd,btd->bst"}> : () -> ()
    %cst_11 = arith.constant dense<0.000000e+00> : vector<1x8x8xf32>
    %27 = tpu.matmul %22, %24, %cst_11 {dimension_numbers = #tpu.dot_dimension_numbers<[2], [2], [1], [1], [0, 0, 0, 1, 1, 1], [0], [0]>} : vector<1x8x8xbf16>, vector<1x8x8xbf16>, vector<1x8x8xf32> -> vector<1x8x8xf32>
    "tpu.trace_stop"() : () -> ()
    %cst_12 = arith.constant dense<0xFF800000> : vector<1x8xf32>
    %28 = vector.multi_reduction <maximumf>, %27, %cst_12 [2] : vector<1x8x8xf32> to vector<1x8xf32>
    %29 = vector.shape_cast %28 : vector<1x8xf32> to vector<1x8x1xf32>
    %30 = vector.broadcast %29 : vector<1x8x1xf32> to vector<1x8x8xf32>
    %31 = arith.subf %27, %30 : vector<1x8x8xf32>
    %32 = math.exp %31 : vector<1x8x8xf32>
    %cst_13 = arith.constant dense<0.000000e+00> : vector<1x8xf32>
    %33 = vector.multi_reduction <add>, %32, %cst_13 [2] : vector<1x8x8xf32> to vector<1x8xf32>
    %34 = vector.shape_cast %33 : vector<1x8xf32> to vector<1x8x1xf32>
    %35 = tpu.reciprocal %34 {approx = true} : vector<1x8x1xf32> -> vector<1x8x1xf32>
    %36 = vector.broadcast %35 : vector<1x8x1xf32> to vector<1x8x8xf32>
    %37 = arith.mulf %32, %36 : vector<1x8x8xf32>
    %38 = arith.addf %19, %37 : vector<1x8x8xf32>
    %39 = arith.truncf %37 : vector<1x8x8xf32> to vector<1x8x8xbf16>
    "tpu.trace_start"() <{level = 10 : i32, message = "bst,btd->bsd"}> : () -> ()
    %cst_14 = arith.constant dense<0.000000e+00> : vector<1x8x8xf32>
    %40 = tpu.matmul %39, %26, %cst_14 {dimension_numbers = #tpu.dot_dimension_numbers<[2], [1], [1], [2], [0, 0, 0, 1, 1, 2], [0], [0]>} : vector<1x8x8xbf16>, vector<1x8x8xbf16>, vector<1x8x8xf32> -> vector<1x8x8xf32>
    "tpu.trace_stop"() : () -> ()
    %41 = vector.shape_cast %40 : vector<1x8x8xf32> to vector<8x8xf32>
    %42 = arith.truncf %41 : vector<8x8xf32> to vector<8x8xbf16>
    %c0_15 = arith.constant 0 : index
    %c0_16 = arith.constant 0 : index
    %c0_17 = arith.constant 0 : index
    %c0_18 = arith.constant 0 : index
    %43 = vector.load %arg5[%c0_15, %c0_16, %c0_17, %c0_18] : memref<1x4x8x32xbf16, #tpu.memory_space<vmem>>, vector<1x1x8x32xbf16>
    %44 = vector.shape_cast %43 : vector<1x1x8x32xbf16> to vector<8x32xbf16>
    %cst_19 = arith.constant dense<0.000000e+00> : vector<8x32xf32>
    %45 = tpu.matmul %42, %44, %cst_19 {dimension_numbers = #tpu.dot_dimension_numbers<[1], [0], [0], [1], [0, 0, 1, 1], [], []>} : vector<8x8xbf16>, vector<8x32xbf16>, vector<8x32xf32> -> vector<8x32xf32>
    %46 = arith.addf %20, %45 : vector<8x32xf32>
    %47 = vector.extract_strided_slice %14 {offsets = [0, 0, 8], sizes = [1, 8, 8], strides = [1, 1, 1]} : vector<1x8x32xf32> to vector<1x8x8xf32>
    %48 = arith.truncf %47 : vector<1x8x8xf32> to vector<1x8x8xbf16>
    %49 = vector.extract_strided_slice %16 {offsets = [0, 0, 8], sizes = [1, 8, 8], strides = [1, 1, 1]} : vector<1x8x32xf32> to vector<1x8x8xf32>
    %50 = arith.truncf %49 : vector<1x8x8xf32> to vector<1x8x8xbf16>
    %51 = vector.extract_strided_slice %18 {offsets = [0, 0, 8], sizes = [1, 8, 8], strides = [1, 1, 1]} : vector<1x8x32xf32> to vector<1x8x8xf32>
    %52 = arith.truncf %51 : vector<1x8x8xf32> to vector<1x8x8xbf16>
    "tpu.trace_start"() <{level = 10 : i32, message = "bsd,btd->bst"}> : () -> ()
    %cst_20 = arith.constant dense<0.000000e+00> : vector<1x8x8xf32>
    %53 = tpu.matmul %48, %50, %cst_20 {dimension_numbers = #tpu.dot_dimension_numbers<[2], [2], [1], [1], [0, 0, 0, 1, 1, 1], [0], [0]>} : vector<1x8x8xbf16>, vector<1x8x8xbf16>, vector<1x8x8xf32> -> vector<1x8x8xf32>
    "tpu.trace_stop"() : () -> ()
    %cst_21 = arith.constant dense<0xFF800000> : vector<1x8xf32>
    %54 = vector.multi_reduction <maximumf>, %53, %cst_21 [2] : vector<1x8x8xf32> to vector<1x8xf32>
    %55 = vector.shape_cast %54 : vector<1x8xf32> to vector<1x8x1xf32>
    %56 = vector.broadcast %55 : vector<1x8x1xf32> to vector<1x8x8xf32>
    %57 = arith.subf %53, %56 : vector<1x8x8xf32>
    %58 = math.exp %57 : vector<1x8x8xf32>
    %cst_22 = arith.constant dense<0.000000e+00> : vector<1x8xf32>
    %59 = vector.multi_reduction <add>, %58, %cst_22 [2] : vector<1x8x8xf32> to vector<1x8xf32>
    %60 = vector.shape_cast %59 : vector<1x8xf32> to vector<1x8x1xf32>
    %61 = tpu.reciprocal %60 {approx = true} : vector<1x8x1xf32> -> vector<1x8x1xf32>
    %62 = vector.broadcast %61 : vector<1x8x1xf32> to vector<1x8x8xf32>
    %63 = arith.mulf %58, %62 : vector<1x8x8xf32>
    %64 = arith.addf %38, %63 : vector<1x8x8xf32>
    %65 = arith.truncf %63 : vector<1x8x8xf32> to vector<1x8x8xbf16>
    "tpu.trace_start"() <{level = 10 : i32, message = "bst,btd->bsd"}> : () -> ()
    %cst_23 = arith.constant dense<0.000000e+00> : vector<1x8x8xf32>
    %66 = tpu.matmul %65, %52, %cst_23 {dimension_numbers = #tpu.dot_dimension_numbers<[2], [1], [1], [2], [0, 0, 0, 1, 1, 2], [0], [0]>} : vector<1x8x8xbf16>, vector<1x8x8xbf16>, vector<1x8x8xf32> -> vector<1x8x8xf32>
    "tpu.trace_stop"() : () -> ()
    %67 = vector.shape_cast %66 : vector<1x8x8xf32> to vector<8x8xf32>
    %68 = arith.truncf %67 : vector<8x8xf32> to vector<8x8xbf16>
    %c0_24 = arith.constant 0 : index
    %c1 = arith.constant 1 : index
    %c0_25 = arith.constant 0 : index
    %c0_26 = arith.constant 0 : index
    %69 = vector.load %arg5[%c0_24, %c1, %c0_25, %c0_26] : memref<1x4x8x32xbf16, #tpu.memory_space<vmem>>, vector<1x1x8x32xbf16>
    %70 = vector.shape_cast %69 : vector<1x1x8x32xbf16> to vector<8x32xbf16>
    %cst_27 = arith.constant dense<0.000000e+00> : vector<8x32xf32>
    %71 = tpu.matmul %68, %70, %cst_27 {dimension_numbers = #tpu.dot_dimension_numbers<[1], [0], [0], [1], [0, 0, 1, 1], [], []>} : vector<8x8xbf16>, vector<8x32xbf16>, vector<8x32xf32> -> vector<8x32xf32>
    %72 = arith.addf %46, %71 : vector<8x32xf32>
    %73 = vector.extract_strided_slice %14 {offsets = [0, 0, 16], sizes = [1, 8, 8], strides = [1, 1, 1]} : vector<1x8x32xf32> to vector<1x8x8xf32>
    %74 = arith.truncf %73 : vector<1x8x8xf32> to vector<1x8x8xbf16>
    %75 = vector.extract_strided_slice %16 {offsets = [0, 0, 16], sizes = [1, 8, 8], strides = [1, 1, 1]} : vector<1x8x32xf32> to vector<1x8x8xf32>
    %76 = arith.truncf %75 : vector<1x8x8xf32> to vector<1x8x8xbf16>
    %77 = vector.extract_strided_slice %18 {offsets = [0, 0, 16], sizes = [1, 8, 8], strides = [1, 1, 1]} : vector<1x8x32xf32> to vector<1x8x8xf32>
    %78 = arith.truncf %77 : vector<1x8x8xf32> to vector<1x8x8xbf16>
    "tpu.trace_start"() <{level = 10 : i32, message = "bsd,btd->bst"}> : () -> ()
    %cst_28 = arith.constant dense<0.000000e+00> : vector<1x8x8xf32>
    %79 = tpu.matmul %74, %76, %cst_28 {dimension_numbers = #tpu.dot_dimension_numbers<[2], [2], [1], [1], [0, 0, 0, 1, 1, 1], [0], [0]>} : vector<1x8x8xbf16>, vector<1x8x8xbf16>, vector<1x8x8xf32> -> vector<1x8x8xf32>
    "tpu.trace_stop"() : () -> ()
    %cst_29 = arith.constant dense<0xFF800000> : vector<1x8xf32>
    %80 = vector.multi_reduction <maximumf>, %79, %cst_29 [2] : vector<1x8x8xf32> to vector<1x8xf32>
    %81 = vector.shape_cast %80 : vector<1x8xf32> to vector<1x8x1xf32>
    %82 = vector.broadcast %81 : vector<1x8x1xf32> to vector<1x8x8xf32>
    %83 = arith.subf %79, %82 : vector<1x8x8xf32>
    %84 = math.exp %83 : vector<1x8x8xf32>
    %cst_30 = arith.constant dense<0.000000e+00> : vector<1x8xf32>
    %85 = vector.multi_reduction <add>, %84, %cst_30 [2] : vector<1x8x8xf32> to vector<1x8xf32>
    %86 = vector.shape_cast %85 : vector<1x8xf32> to vector<1x8x1xf32>
    %87 = tpu.reciprocal %86 {approx = true} : vector<1x8x1xf32> -> vector<1x8x1xf32>
    %88 = vector.broadcast %87 : vector<1x8x1xf32> to vector<1x8x8xf32>
    %89 = arith.mulf %84, %88 : vector<1x8x8xf32>
    %90 = arith.addf %64, %89 : vector<1x8x8xf32>
    %91 = arith.truncf %89 : vector<1x8x8xf32> to vector<1x8x8xbf16>
    "tpu.trace_start"() <{level = 10 : i32, message = "bst,btd->bsd"}> : () -> ()
    %cst_31 = arith.constant dense<0.000000e+00> : vector<1x8x8xf32>
    %92 = tpu.matmul %91, %78, %cst_31 {dimension_numbers = #tpu.dot_dimension_numbers<[2], [1], [1], [2], [0, 0, 0, 1, 1, 2], [0], [0]>} : vector<1x8x8xbf16>, vector<1x8x8xbf16>, vector<1x8x8xf32> -> vector<1x8x8xf32>
    "tpu.trace_stop"() : () -> ()
    %93 = vector.shape_cast %92 : vector<1x8x8xf32> to vector<8x8xf32>
    %94 = arith.truncf %93 : vector<8x8xf32> to vector<8x8xbf16>
    %c0_32 = arith.constant 0 : index
    %c2 = arith.constant 2 : index
    %c0_33 = arith.constant 0 : index
    %c0_34 = arith.constant 0 : index
    %95 = vector.load %arg5[%c0_32, %c2, %c0_33, %c0_34] : memref<1x4x8x32xbf16, #tpu.memory_space<vmem>>, vector<1x1x8x32xbf16>
    %96 = vector.shape_cast %95 : vector<1x1x8x32xbf16> to vector<8x32xbf16>
    %cst_35 = arith.constant dense<0.000000e+00> : vector<8x32xf32>
    %97 = tpu.matmul %94, %96, %cst_35 {dimension_numbers = #tpu.dot_dimension_numbers<[1], [0], [0], [1], [0, 0, 1, 1], [], []>} : vector<8x8xbf16>, vector<8x32xbf16>, vector<8x32xf32> -> vector<8x32xf32>
    %98 = arith.addf %72, %97 : vector<8x32xf32>
    %99 = vector.extract_strided_slice %14 {offsets = [0, 0, 24], sizes = [1, 8, 8], strides = [1, 1, 1]} : vector<1x8x32xf32> to vector<1x8x8xf32>
    %100 = arith.truncf %99 : vector<1x8x8xf32> to vector<1x8x8xbf16>
    %101 = vector.extract_strided_slice %16 {offsets = [0, 0, 24], sizes = [1, 8, 8], strides = [1, 1, 1]} : vector<1x8x32xf32> to vector<1x8x8xf32>
    %102 = arith.truncf %101 : vector<1x8x8xf32> to vector<1x8x8xbf16>
    %103 = vector.extract_strided_slice %18 {offsets = [0, 0, 24], sizes = [1, 8, 8], strides = [1, 1, 1]} : vector<1x8x32xf32> to vector<1x8x8xf32>
    %104 = arith.truncf %103 : vector<1x8x8xf32> to vector<1x8x8xbf16>
    "tpu.trace_start"() <{level = 10 : i32, message = "bsd,btd->bst"}> : () -> ()
    %cst_36 = arith.constant dense<0.000000e+00> : vector<1x8x8xf32>
    %105 = tpu.matmul %100, %102, %cst_36 {dimension_numbers = #tpu.dot_dimension_numbers<[2], [2], [1], [1], [0, 0, 0, 1, 1, 1], [0], [0]>} : vector<1x8x8xbf16>, vector<1x8x8xbf16>, vector<1x8x8xf32> -> vector<1x8x8xf32>
    "tpu.trace_stop"() : () -> ()
    %cst_37 = arith.constant dense<0xFF800000> : vector<1x8xf32>
    %106 = vector.multi_reduction <maximumf>, %105, %cst_37 [2] : vector<1x8x8xf32> to vector<1x8xf32>
    %107 = vector.shape_cast %106 : vector<1x8xf32> to vector<1x8x1xf32>
    %108 = vector.broadcast %107 : vector<1x8x1xf32> to vector<1x8x8xf32>
    %109 = arith.subf %105, %108 : vector<1x8x8xf32>
    %110 = math.exp %109 : vector<1x8x8xf32>
    %cst_38 = arith.constant dense<0.000000e+00> : vector<1x8xf32>
    %111 = vector.multi_reduction <add>, %110, %cst_38 [2] : vector<1x8x8xf32> to vector<1x8xf32>
    %112 = vector.shape_cast %111 : vector<1x8xf32> to vector<1x8x1xf32>
    %113 = tpu.reciprocal %112 {approx = true} : vector<1x8x1xf32> -> vector<1x8x1xf32>
    %114 = vector.broadcast %113 : vector<1x8x1xf32> to vector<1x8x8xf32>
    %115 = arith.mulf %110, %114 : vector<1x8x8xf32>
    %116 = arith.addf %90, %115 : vector<1x8x8xf32>
    %117 = arith.truncf %115 : vector<1x8x8xf32> to vector<1x8x8xbf16>
    "tpu.trace_start"() <{level = 10 : i32, message = "bst,btd->bsd"}> : () -> ()
    %cst_39 = arith.constant dense<0.000000e+00> : vector<1x8x8xf32>
    %118 = tpu.matmul %117, %104, %cst_39 {dimension_numbers = #tpu.dot_dimension_numbers<[2], [1], [1], [2], [0, 0, 0, 1, 1, 2], [0], [0]>} : vector<1x8x8xbf16>, vector<1x8x8xbf16>, vector<1x8x8xf32> -> vector<1x8x8xf32>
    "tpu.trace_stop"() : () -> ()
    %119 = vector.shape_cast %118 : vector<1x8x8xf32> to vector<8x8xf32>
    %120 = arith.truncf %119 : vector<8x8xf32> to vector<8x8xbf16>
    %c0_40 = arith.constant 0 : index
    %c3 = arith.constant 3 : index
    %c0_41 = arith.constant 0 : index
    %c0_42 = arith.constant 0 : index
    %121 = vector.load %arg5[%c0_40, %c3, %c0_41, %c0_42] : memref<1x4x8x32xbf16, #tpu.memory_space<vmem>>, vector<1x1x8x32xbf16>
    %122 = vector.shape_cast %121 : vector<1x1x8x32xbf16> to vector<8x32xbf16>
    %cst_43 = arith.constant dense<0.000000e+00> : vector<8x32xf32>
    %123 = tpu.matmul %120, %122, %cst_43 {dimension_numbers = #tpu.dot_dimension_numbers<[1], [0], [0], [1], [0, 0, 1, 1], [], []>} : vector<8x8xbf16>, vector<8x32xbf16>, vector<8x32xf32> -> vector<8x32xf32>
    %124 = arith.addf %98, %123 : vector<8x32xf32>
    %cst_44 = arith.constant 2.500000e-01 : f32
    %125 = vector.broadcast %cst_44 : f32 to vector<1x8x8xf32>
    %126 = arith.mulf %116, %125 : vector<1x8x8xf32>
    %cst_45 = arith.constant 1.000000e-30 : f32
    %127 = vector.broadcast %cst_45 : f32 to vector<1x8x8xf32>
    %128 = arith.maximumf %126, %127 : vector<1x8x8xf32>
    %129 = math.log %128 : vector<1x8x8xf32>
    %cst_46 = arith.constant 0.000000e+00 : f32
    %130 = vector.broadcast %cst_46 : f32 to vector<1x8x8xf32>
    %131 = arith.cmpf ogt, %126, %130 : vector<1x8x8xf32>
    %132 = arith.mulf %126, %129 : vector<1x8x8xf32>
    %cst_47 = arith.constant 0.000000e+00 : f32
    %133 = vector.broadcast %cst_47 : f32 to vector<1x8x8xf32>
    %134 = arith.select %131, %132, %133 : vector<1x8x8xi1>, vector<1x8x8xf32>
    %cst_48 = arith.constant dense<0.000000e+00> : vector<1x8xf32>
    %135 = vector.multi_reduction <add>, %134, %cst_48 [2] : vector<1x8x8xf32> to vector<1x8xf32>
    %cst_49 = arith.constant 0.000000e+00 : f32
    %136 = vector.broadcast %cst_49 : f32 to vector<1x8xf32>
    %137 = arith.subf %136, %135 : vector<1x8xf32>
    %c0_50 = arith.constant 0 : index
    %c0_51 = arith.constant 0 : index
    %c0_52 = arith.constant 0 : index
    %c0_53 = arith.constant 0 : index
    %138 = vector.load %arg16[%c0_50, %c0_51, %c0_52, %c0_53] : memref<1x1x1x8xf32, #tpu.memory_space<vmem>>, vector<1x1x1x8xf32>
    %139 = vector.shape_cast %138 : vector<1x1x1x8xf32> to vector<1x8xf32>
    %140 = vector.shape_cast %137 : vector<1x8xf32> to vector<1x1x1x8xf32>
    tpu.vector_store %arg16[%c0_50, %c0_51, %c0_52, %c0_53], %140 {strides = array<i32>} : memref<1x1x1x8xf32, #tpu.memory_space<vmem>>, vector<1x1x1x8xf32>,
    %c0_54 = arith.constant 0 : index
    %c0_55 = arith.constant 0 : index
    %c0_56 = arith.constant 0 : index
    %141 = vector.load %arg6[%c0_54, %c0_55, %c0_56] : memref<1x1x32xf32, #tpu.memory_space<vmem>>, vector<1x1x32xf32>
    %142 = vector.shape_cast %141 : vector<1x1x32xf32> to vector<1x32xf32>
    %143 = vector.broadcast %142 : vector<1x32xf32> to vector<8x32xf32>
    %144 = arith.addf %124, %143 : vector<8x32xf32>
    %145 = arith.addf %4, %144 : vector<8x32xf32>
    %cst_57 = arith.constant dense<0.000000e+00> : vector<8xf32>
    %146 = vector.multi_reduction <add>, %145, %cst_57 [1] : vector<8x32xf32> to vector<8xf32>
    %147 = vector.shape_cast %146 : vector<8xf32> to vector<8x1xf32>
    %cst_58 = arith.constant 3.200000e+01 : f32
    %148 = vector.broadcast %cst_58 : f32 to vector<8x1xf32>
    %149 = arith.divf %147, %148 : vector<8x1xf32>
    %150 = vector.broadcast %149 : vector<8x1xf32> to vector<8x32xf32>
    %151 = arith.subf %145, %150 : vector<8x32xf32>
    %152 = arith.mulf %151, %151 : vector<8x32xf32>
    %cst_59 = arith.constant dense<0.000000e+00> : vector<8xf32>
    %153 = vector.multi_reduction <add>, %152, %cst_59 [1] : vector<8x32xf32> to vector<8xf32>
    %154 = vector.shape_cast %153 : vector<8xf32> to vector<8x1xf32>
    %cst_60 = arith.constant 3.200000e+01 : f32
    %155 = vector.broadcast %cst_60 : f32 to vector<8x1xf32>
    %156 = arith.divf %154, %155 : vector<8x1xf32>
    %157 = vector.broadcast %149 : vector<8x1xf32> to vector<8x32xf32>
    %158 = arith.subf %145, %157 : vector<8x32xf32>
    %cst_61 = arith.constant 9.99999974E-6 : f32
    %159 = vector.broadcast %cst_61 : f32 to vector<8x1xf32>
    %160 = arith.addf %156, %159 : vector<8x1xf32>
    %161 = math.rsqrt %160 : vector<8x1xf32>
    %162 = vector.broadcast %161 : vector<8x1xf32> to vector<8x32xf32>
    %163 = arith.mulf %158, %162 : vector<8x32xf32>
    %c0_62 = arith.constant 0 : index
    %c0_63 = arith.constant 0 : index
    %c0_64 = arith.constant 0 : index
    %164 = vector.load %arg11[%c0_62, %c0_63, %c0_64] : memref<1x1x32xf32, #tpu.memory_space<vmem>>, vector<1x1x32xf32>
    %165 = vector.shape_cast %164 : vector<1x1x32xf32> to vector<1x32xf32>
    %166 = vector.broadcast %165 : vector<1x32xf32> to vector<8x32xf32>
    %167 = arith.mulf %163, %166 : vector<8x32xf32>
    %c0_65 = arith.constant 0 : index
    %c0_66 = arith.constant 0 : index
    %c0_67 = arith.constant 0 : index
    %168 = vector.load %arg12[%c0_65, %c0_66, %c0_67] : memref<1x1x32xf32, #tpu.memory_space<vmem>>, vector<1x1x32xf32>
    %169 = vector.shape_cast %168 : vector<1x1x32xf32> to vector<1x32xf32>
    %170 = vector.broadcast %169 : vector<1x32xf32> to vector<8x32xf32>
    %171 = arith.addf %167, %170 : vector<8x32xf32>
    %172 = arith.truncf %171 : vector<8x32xf32> to vector<8x32xbf16>
    %c0_68 = arith.constant 0 : index
    %c0_69 = arith.constant 0 : index
    %c0_70 = arith.constant 0 : index
    %173 = vector.load %arg7[%c0_68, %c0_69, %c0_70] : memref<1x32x64xbf16, #tpu.memory_space<vmem>>, vector<1x32x64xbf16>
    %174 = vector.shape_cast %173 : vector<1x32x64xbf16> to vector<32x64xbf16>
    %cst_71 = arith.constant dense<0.000000e+00> : vector<8x64xf32>
    %175 = tpu.matmul %172, %174, %cst_71 {dimension_numbers = #tpu.dot_dimension_numbers<[1], [0], [0], [1], [0, 0, 1, 1], [], []>} : vector<8x32xbf16>, vector<32x64xbf16>, vector<8x64xf32> -> vector<8x64xf32>
    %c0_72 = arith.constant 0 : index
    %c0_73 = arith.constant 0 : index
    %c0_74 = arith.constant 0 : index
    %176 = vector.load %arg8[%c0_72, %c0_73, %c0_74] : memref<1x1x64xf32, #tpu.memory_space<vmem>>, vector<1x1x64xf32>
    %177 = vector.shape_cast %176 : vector<1x1x64xf32> to vector<1x64xf32>
    %178 = vector.broadcast %177 : vector<1x64xf32> to vector<8x64xf32>
    %179 = arith.addf %175, %178 : vector<8x64xf32>
    %cst_75 = arith.constant 0.000000e+00 : f32
    %180 = vector.broadcast %cst_75 : f32 to vector<8x64xf32>
    %181 = arith.maximumf %179, %180 : vector<8x64xf32>
    %182 = arith.truncf %181 : vector<8x64xf32> to vector<8x64xbf16>
    %c0_76 = arith.constant 0 : index
    %c0_77 = arith.constant 0 : index
    %c0_78 = arith.constant 0 : index
    %183 = vector.load %arg9[%c0_76, %c0_77, %c0_78] : memref<1x64x32xbf16, #tpu.memory_space<vmem>>, vector<1x64x32xbf16>
    %184 = vector.shape_cast %183 : vector<1x64x32xbf16> to vector<64x32xbf16>
    %cst_79 = arith.constant dense<0.000000e+00> : vector<8x32xf32>
    %185 = tpu.matmul %182, %184, %cst_79 {dimension_numbers = #tpu.dot_dimension_numbers<[1], [0], [0], [1], [0, 0, 1, 1], [], []>} : vector<8x64xbf16>, vector<64x32xbf16>, vector<8x32xf32> -> vector<8x32xf32>
    %c0_80 = arith.constant 0 : index
    %c0_81 = arith.constant 0 : index
    %c0_82 = arith.constant 0 : index
    %186 = vector.load %arg10[%c0_80, %c0_81, %c0_82] : memref<1x1x32xf32, #tpu.memory_space<vmem>>, vector<1x1x32xf32>
    %187 = vector.shape_cast %186 : vector<1x1x32xf32> to vector<1x32xf32>
    %188 = vector.broadcast %187 : vector<1x32xf32> to vector<8x32xf32>
    %189 = arith.addf %185, %188 : vector<8x32xf32>
    %190 = arith.addf %171, %189 : vector<8x32xf32>
    %cst_83 = arith.constant dense<0.000000e+00> : vector<8xf32>
    %191 = vector.multi_reduction <add>, %190, %cst_83 [1] : vector<8x32xf32> to vector<8xf32>
    %192 = vector.shape_cast %191 : vector<8xf32> to vector<8x1xf32>
    %cst_84 = arith.constant 3.200000e+01 : f32
    %193 = vector.broadcast %cst_84 : f32 to vector<8x1xf32>
    %194 = arith.divf %192, %193 : vector<8x1xf32>
    %195 = vector.broadcast %194 : vector<8x1xf32> to vector<8x32xf32>
    %196 = arith.subf %190, %195 : vector<8x32xf32>
    %197 = arith.mulf %196, %196 : vector<8x32xf32>
    %cst_85 = arith.constant dense<0.000000e+00> : vector<8xf32>
    %198 = vector.multi_reduction <add>, %197, %cst_85 [1] : vector<8x32xf32> to vector<8xf32>
    %199 = vector.shape_cast %198 : vector<8xf32> to vector<8x1xf32>
    %cst_86 = arith.constant 3.200000e+01 : f32
    %200 = vector.broadcast %cst_86 : f32 to vector<8x1xf32>
    %201 = arith.divf %199, %200 : vector<8x1xf32>
    %202 = vector.broadcast %194 : vector<8x1xf32> to vector<8x32xf32>
    %203 = arith.subf %190, %202 : vector<8x32xf32>
    %cst_87 = arith.constant 9.99999974E-6 : f32
    %204 = vector.broadcast %cst_87 : f32 to vector<8x1xf32>
    %205 = arith.addf %201, %204 : vector<8x1xf32>
    %206 = math.rsqrt %205 : vector<8x1xf32>
    %207 = vector.broadcast %206 : vector<8x1xf32> to vector<8x32xf32>
    %208 = arith.mulf %203, %207 : vector<8x32xf32>
    %c0_88 = arith.constant 0 : index
    %c0_89 = arith.constant 0 : index
    %c0_90 = arith.constant 0 : index
    %209 = vector.load %arg13[%c0_88, %c0_89, %c0_90] : memref<1x1x32xf32, #tpu.memory_space<vmem>>, vector<1x1x32xf32>
    %210 = vector.shape_cast %209 : vector<1x1x32xf32> to vector<1x32xf32>
    %211 = vector.broadcast %210 : vector<1x32xf32> to vector<8x32xf32>
    %212 = arith.mulf %208, %211 : vector<8x32xf32>
    %c0_91 = arith.constant 0 : index
    %c0_92 = arith.constant 0 : index
    %c0_93 = arith.constant 0 : index
    %213 = vector.load %arg14[%c0_91, %c0_92, %c0_93] : memref<1x1x32xf32, #tpu.memory_space<vmem>>, vector<1x1x32xf32>
    %214 = vector.shape_cast %213 : vector<1x1x32xf32> to vector<1x32xf32>
    %215 = vector.broadcast %214 : vector<1x32xf32> to vector<8x32xf32>
    %216 = arith.addf %212, %215 : vector<8x32xf32>
    %c0_94 = arith.constant 0 : index
    %c0_95 = arith.constant 0 : index
    %c0_96 = arith.constant 0 : index
    %217 = vector.load %arg15[%c0_94, %c0_95, %c0_96] : memref<1x8x32xf32, #tpu.memory_space<vmem>>, vector<1x8x32xf32>
    %218 = vector.shape_cast %217 : vector<1x8x32xf32> to vector<8x32xf32>
    %219 = vector.shape_cast %216 : vector<8x32xf32> to vector<1x8x32xf32>
    tpu.vector_store %arg15[%c0_94, %c0_95, %c0_96], %219 {strides = array<i32>} : memref<1x8x32xf32, #tpu.memory_space<vmem>>, vector<1x8x32xf32>,
    return
  }
  func.func @transform_0(%arg0: i32, %arg1: i32) -> (i32, i32, i32) {
    %c0_i32 = arith.constant 0 : i32
    %c0_i32_0 = arith.constant 0 : i32
    %c0_i32_1 = arith.constant 0 : i32
    return %arg0, %c0_i32, %c0_i32_0 : i32, i32, i32
  }
  func.func @transform_1(%arg0: i32, %arg1: i32) -> (i32, i32, i32) {
    %c0_i32 = arith.constant 0 : i32
    %c0_i32_0 = arith.constant 0 : i32
    %c0_i32_1 = arith.constant 0 : i32
    return %arg1, %c0_i32, %c0_i32_0 : i32, i32, i32
  }
  func.func @transform_2(%arg0: i32, %arg1: i32) -> (i32, i32, i32) {
    %c0_i32 = arith.constant 0 : i32
    %c0_i32_0 = arith.constant 0 : i32
    %c0_i32_1 = arith.constant 0 : i32
    return %arg1, %c0_i32, %c0_i32_0 : i32, i32, i32
  }
  func.func @transform_3(%arg0: i32, %arg1: i32) -> (i32, i32, i32, i32) {
    %c0_i32 = arith.constant 0 : i32
    %c0_i32_0 = arith.constant 0 : i32
    %c0_i32_1 = arith.constant 0 : i32
    %c0_i32_2 = arith.constant 0 : i32
    return %arg1, %c0_i32, %c0_i32_0, %c0_i32_1 : i32, i32, i32, i32
  }
  func.func @transform_4(%arg0: i32, %arg1: i32) -> (i32, i32, i32) {
    %c0_i32 = arith.constant 0 : i32
    %c0_i32_0 = arith.constant 0 : i32
    %c0_i32_1 = arith.constant 0 : i32
    return %arg1, %c0_i32, %c0_i32_0 : i32, i32, i32
  }
  func.func @transform_5(%arg0: i32, %arg1: i32) -> (i32, i32, i32) {
    %c0_i32 = arith.constant 0 : i32
    %c0_i32_0 = arith.constant 0 : i32
    %c0_i32_1 = arith.constant 0 : i32
    return %arg1, %c0_i32, %c0_i32_0 : i32, i32, i32
  }
  func.func @transform_6(%arg0: i32, %arg1: i32) -> (i32, i32, i32) {
    %c0_i32 = arith.constant 0 : i32
    %c0_i32_0 = arith.constant 0 : i32
    %c0_i32_1 = arith.constant 0 : i32
    return %arg1, %c0_i32, %c0_i32_0 : i32, i32, i32
  }
  func.func @transform_7(%arg0: i32, %arg1: i32) -> (i32, i32, i32) {
    %c0_i32 = arith.constant 0 : i32
    %c0_i32_0 = arith.constant 0 : i32
    %c0_i32_1 = arith.constant 0 : i32
    return %arg1, %c0_i32, %c0_i32_0 : i32, i32, i32
  }
  func.func @transform_8(%arg0: i32, %arg1: i32) -> (i32, i32, i32) {
    %c0_i32 = arith.constant 0 : i32
    %c0_i32_0 = arith.constant 0 : i32
    %c0_i32_1 = arith.constant 0 : i32
    return %arg1, %c0_i32, %c0_i32_0 : i32, i32, i32
  }
  func.func @transform_9(%arg0: i32, %arg1: i32) -> (i32, i32, i32) {
    %c0_i32 = arith.constant 0 : i32
    %c0_i32_0 = arith.constant 0 : i32
    %c0_i32_1 = arith.constant 0 : i32
    return %arg1, %c0_i32, %c0_i32_0 : i32, i32, i32
  }
  func.func @transform_10(%arg0: i32, %arg1: i32) -> (i32, i32, i32) {
    %c0_i32 = arith.constant 0 : i32
    %c0_i32_0 = arith.constant 0 : i32
    %c0_i32_1 = arith.constant 0 : i32
    return %arg1, %c0_i32, %c0_i32_0 : i32, i32, i32
  }
  func.func @transform_11(%arg0: i32, %arg1: i32) -> (i32, i32, i32) {
    %c0_i32 = arith.constant 0 : i32
    %c0_i32_0 = arith.constant 0 : i32
    %c0_i32_1 = arith.constant 0 : i32
    return %arg1, %c0_i32, %c0_i32_0 : i32, i32, i32
  }
  func.func @transform_12(%arg0: i32, %arg1: i32) -> (i32, i32, i32) {
    %c0_i32 = arith.constant 0 : i32
    %c0_i32_0 = arith.constant 0 : i32
    %c0_i32_1 = arith.constant 0 : i32
    return %arg1, %c0_i32, %c0_i32_0 : i32, i32, i32
  }
  func.func @transform_13(%arg0: i32, %arg1: i32) -> (i32, i32, i32) {
    %c0_i32 = arith.constant 0 : i32
    %c0_i32_0 = arith.constant 0 : i32
    %c0_i32_1 = arith.constant 0 : i32
    return %arg0, %c0_i32, %c0_i32_0 : i32, i32, i32
  }
  func.func @transform_14(%arg0: i32, %arg1: i32) -> (i32, i32, i32, i32) {
    %c0_i32 = arith.constant 0 : i32
    %c0_i32_0 = arith.constant 0 : i32
    %c0_i32_1 = arith.constant 0 : i32
    return %arg1, %arg0, %c0_i32, %c0_i32_0 : i32, i32, i32, i32
  }
}

</mosaic_0001>

<llo_original>
// kernel: tpu_custom_call.1
$region0: #{tpu_custom_call.1}
  #allocation0 [shape = 'u32[]', space=smem, size = 0x4, offset = 0x4, fixed_abs, tag = 'smem constant byte address 0x4 - core index']
  #allocation1 [shape = 'u32[144,128]{1,0:T(1,128)}', space=vmem, size = 0x12000, scoped, tag = 'internal scratch']
  %s0 = inlined_call_operand.hbm [shape: f32[2,8,32], index: 0, kind: input, shape index: {}]
  %s1 = inlined_call_operand.vmem [shape: bf16[2,32,96], index: 1, kind: input, shape index: {}]
  %s2 = inlined_call_operand.vmem [shape: f32[2,1,96], index: 2, kind: input, shape index: {}]
  %s3 = inlined_call_operand.vmem [shape: bf16[2,4,8,32], index: 3, kind: input, shape index: {}]
  %s4 = inlined_call_operand.vmem [shape: f32[2,1,32], index: 4, kind: input, shape index: {}]
  %s5 = inlined_call_operand.vmem [shape: bf16[2,32,64], index: 5, kind: input, shape index: {}]
  %s6 = inlined_call_operand.vmem [shape: f32[2,1,64], index: 6, kind: input, shape index: {}]
  %s7 = inlined_call_operand.vmem [shape: bf16[2,64,32], index: 7, kind: input, shape index: {}]
  %s8 = inlined_call_operand.vmem [shape: f32[2,1,32], index: 8, kind: input, shape index: {}]
  %s9 = inlined_call_operand.vmem [shape: f32[2,1,32], index: 9, kind: input, shape index: {}]
  %s10 = inlined_call_operand.vmem [shape: f32[2,1,32], index: 10, kind: input, shape index: {}]
  %s11 = inlined_call_operand.vmem [shape: f32[2,1,32], index: 11, kind: input, shape index: {}]
  %s12 = inlined_call_operand.vmem [shape: f32[2,1,32], index: 12, kind: input, shape index: {}]
  %s13 = inlined_call_operand.hbm [shape: f32[2,8,32], index: 13, kind: output, shape index: {0}]
  %s14 = inlined_call_operand.hbm [shape: f32[2,2,1,8], index: 14, kind: output, shape index: {1}]
  %15 = xla_tuple %s13, %s14
  %s16 = sld [smem:[#allocation0]]
  $region101: #{tpu_custom_call.1} parent=0
    _
  %s18 = ssub.s32 1, %s16
  %s19 = scalar_select 0, %s18, %s16
  $region1: #{tpu_custom_call.1} parent=0
    #allocation2 [shape = 'u8[8192]{0}', space=vmem, size = 0x2000, scoped, tag = 'input window, operand 0']
    #allocation3 [shape = 's32[2]{0}', space=sflag, size = 0x8, scoped, tag = 'scoped memory for tpu_custom_call.1']
    #allocation4 [shape = 's32[2]{0}', space=sflag, size = 0x8, scoped, tag = 'scoped memory for tpu_custom_call.1']
    #allocation5 [shape = 'u8[8192]{0}', space=vmem, size = 0x2000, scoped, tag = 'output window, operand 0']
    #allocation6 [shape = 'u8[1024]{0}', space=vmem, size = 0x400, scoped, tag = 'output window, operand 1']
    #allocation7 [shape = 's32[2]{0}', space=sflag, size = 0x8, scoped, tag = 'scoped memory for tpu_custom_call.1']
    %20 = vsyncpa [#allocation3], 0
    %s21 = scalar_lea.sflag [#allocation3], 1
    %22 = vsyncpa %s21, 0
    %23 = vsyncpa [#allocation4], 0
    %s24 = scalar_lea.sflag [#allocation4], 1
    %25 = vsyncpa %s24, 0
    %26 = vsyncpa [#allocation7], 0
    %s27 = scalar_lea.sflag [#allocation7], 1
    %28 = vsyncpa %s27, 0
    loop: start=0, step=1, limit=6
    $region2: #{tpu_custom_call.1} parent=1 // loop_pre_header
      _
    $region3: #{tpu_custom_call.1} parent=1 // loop_header
      %s30 = sphi 0, %s34
      %p31 = scmp.ge.s32.totalorder %s30, 6
      %s37 = sphi 0, %s49
      %s38 = sphi 0, %s45
      %s39 = sphi 0, %s37
      %s40 = sphi 0, %s38
      %s41 = sphi 0, %s39
      %s42 = sphi 0, %s40
      %s52 = sphi 0, %s54
      %s55 = sphi 0, %s52
      %s56 = sphi 0, %s55
      %s72 = sphi 0, %s56
      %s78 = sphi 0, %s80
      %s81 = sphi 0, %s78
      %s82 = sphi 0, %s81
      %s98 = sphi 0, %s82
      %s104 = sphi 0, %s106
      %s107 = sphi 0, %s104
      %s108 = sphi 0, %s107
      %s124 = sphi 0, %s108
      %s130 = sphi 0, %s132
      %s133 = sphi 0, %s130
      %s134 = sphi 0, %s133
      %s150 = sphi 0, %s134
      %s156 = sphi 0, %s158
      %s159 = sphi 0, %s156
      %s160 = sphi 0, %s159
      %s176 = sphi 0, %s160
      %s182 = sphi 0, %s184
      %s185 = sphi 0, %s182
      %s186 = sphi 0, %s185
      %s202 = sphi 0, %s186
      %s208 = sphi 0, %s210
      %s211 = sphi 0, %s208
      %s212 = sphi 0, %s211
      %s228 = sphi 0, %s212
      %s234 = sphi 0, %s236
      %s237 = sphi 0, %s234
      %s238 = sphi 0, %s237
      %s254 = sphi 0, %s238
      %s260 = sphi 0, %s262
      %s263 = sphi 0, %s260
      %s264 = sphi 0, %s263
      %s280 = sphi 0, %s264
      %s286 = sphi 0, %s288
      %s289 = sphi 0, %s286
      %s290 = sphi 0, %s289
      %s306 = sphi 0, %s290
      %s312 = sphi 0, %s314
      %s315 = sphi 0, %s312
      %s316 = sphi 0, %s315
      %s332 = sphi 0, %s316
      %s338 = sphi 0, %s340
      %s341 = sphi 0, %s338
      %s342 = sphi 0, %s341
      %s358 = sphi 0, %s342
      %s364 = sphi 0, %s366
      %s367 = sphi 0, %s364
      %s368 = sphi 0, %s367
      %s384 = sphi 0, %s368
      %s390 = sphi 0, %s392
      %s393 = sphi 0, %s390
      %s394 = sphi 0, %s393
      %s410 = sphi 0, %s394
      %s418 = sphi 0, %s420
      %s421 = sphi 0, %s418
      %s422 = sphi 0, %s421
      %s438 = sphi 0, %s422
    $region4: #{tpu_custom_call.1} parent=1 // loop_header_branch
      %33 = sbr.rel (%p31) target = $region8
    $region5: #{tpu_custom_call.1} parent=1 // loop_body
      %s35 = ssub.s32 %s30, 1
      %s36 = ssub.s32 %s30, 2
      %s43 = sadd.s32 1, %s38
      %p44 = scmp.ge.s32.totalorder %s43, 2
      %s45 = scalar_select %p44, 0, %s43
      %s46 = sadd.s32 1, %s37
      %s47 = scalar_select %p44, %s46, %s37
      %p48 = scmp.ge.s32.totalorder %s47, 2
      %s49 = scalar_select %p48, 0, %s47
      %s50 = ssub.s32 %s37, %s49
      %p51 = scmp.eq.s32.totalorder %s50, 0
      %s53 = sadd.s32 %s52, 1
      %s54 = scalar_select %p51, %s52, %s53
      %p57 = pneg %p51
      %p58 = scmp.eq.s32.totalorder %s30, 3
      %p59 = por %p57, %p58
      %p60 = scmp.ne.s32.totalorder %s52, %s55
      %p61 = scmp.eq.s32.totalorder %s30, 0
      %p62 = por %p60, %p61
      %p63 = scmp.ne.s32.totalorder %s52, %s55
      %p64 = scmp.eq.s32.totalorder %s35, 3
      %p65 = por %p63, %p64
      %p66 = scmp.ne.s32.totalorder %s55, %s56
      %p67 = scmp.eq.s32.totalorder %s35, 0
      %p68 = por %p66, %p67
      %p69 = scmp.ne.s32.totalorder %s55, %s56
      %p70 = scmp.eq.s32.totalorder %s36, 3
      %p71 = por %p69, %p70
      %p73 = scmp.ne.s32.totalorder %s56, %s72
      %p74 = scmp.eq.s32.totalorder %s36, 0
      %p75 = por %p73, %p74
      %s76 = ssub.s32 %s38, %s45
      %p77 = scmp.eq.s32.totalorder %s76, 0
      %s79 = sadd.s32 %s78, 1
      %s80 = scalar_select %p77, %s78, %s79
      %p83 = pneg %p77
      %p84 = scmp.eq.s32.totalorder %s30, 3
      %p85 = por %p83, %p84
      %p86 = scmp.ne.s32.totalorder %s78, %s81
      %p87 = scmp.eq.s32.totalorder %s30, 0
      %p88 = por %p86, %p87
      %p89 = scmp.ne.s32.totalorder %s78, %s81
      %p90 = scmp.eq.s32.totalorder %s35, 3
      %p91 = por %p89, %p90
      %p92 = scmp.ne.s32.totalorder %s81, %s82
      %p93 = scmp.eq.s32.totalorder %s35, 0
      %p94 = por %p92, %p93
      %p95 = scmp.ne.s32.totalorder %s81, %s82
      %p96 = scmp.eq.s32.totalorder %s36, 3
      %p97 = por %p95, %p96
      %p99 = scmp.ne.s32.totalorder %s82, %s98
      %p100 = scmp.eq.s32.totalorder %s36, 0
      %p101 = por %p99, %p100
      %s102 = ssub.s32 %s38, %s45
      %p103 = scmp.eq.s32.totalorder %s102, 0
      %s105 = sadd.s32 %s104, 1
      %s106 = scalar_select %p103, %s104, %s105
      %p109 = pneg %p103
      %p110 = scmp.eq.s32.totalorder %s30, 3
      %p111 = por %p109, %p110
      %p112 = scmp.ne.s32.totalorder %s104, %s107
      %p113 = scmp.eq.s32.totalorder %s30, 0
      %p114 = por %p112, %p113
      %p115 = scmp.ne.s32.totalorder %s104, %s107
      %p116 = scmp.eq.s32.totalorder %s35, 3
      %p117 = por %p115, %p116
      %p118 = scmp.ne.s32.totalorder %s107, %s108
      %p119 = scmp.eq.s32.totalorder %s35, 0
      %p120 = por %p118, %p119
      %p121 = scmp.ne.s32.totalorder %s107, %s108
      %p122 = scmp.eq.s32.totalorder %s36, 3
      %p123 = por %p121, %p122
      %p125 = scmp.ne.s32.totalorder %s108, %s124
      %p126 = scmp.eq.s32.totalorder %s36, 0
      %p127 = por %p125, %p126
      %s128 = ssub.s32 %s38, %s45
      %p129 = scmp.eq.s32.totalorder %s128, 0
      %s131 = sadd.s32 %s130, 1
      %s132 = scalar_select %p129, %s130, %s131
      %p135 = pneg %p129
      %p136 = scmp.eq.s32.totalorder %s30, 3
      %p137 = por %p135, %p136
      %p138 = scmp.ne.s32.totalorder %s130, %s133
      %p139 = scmp.eq.s32.totalorder %s30, 0
      %p140 = por %p138, %p139
      %p141 = scmp.ne.s32.totalorder %s130, %s133
      %p142 = scmp.eq.s32.totalorder %s35, 3
      %p143 = por %p141, %p142
      %p144 = scmp.ne.s32.totalorder %s133, %s134
      %p145 = scmp.eq.s32.totalorder %s35, 0
      %p146 = por %p144, %p145
      %p147 = scmp.ne.s32.totalorder %s133, %s134
      %p148 = scmp.eq.s32.totalorder %s36, 3
      %p149 = por %p147, %p148
      %p151 = scmp.ne.s32.totalorder %s134, %s150
      %p152 = scmp.eq.s32.totalorder %s36, 0
      %p153 = por %p151, %p152
      %s154 = ssub.s32 %s38, %s45
      %p155 = scmp.eq.s32.totalorder %s154, 0
      %s157 = sadd.s32 %s156, 1
      %s158 = scalar_select %p155, %s156, %s157
      %p161 = pneg %p155
      %p162 = scmp.eq.s32.totalorder %s30, 3
      %p163 = por %p161, %p162
      %p164 = scmp.ne.s32.totalorder %s156, %s159
      %p165 = scmp.eq.s32.totalorder %s30, 0
      %p166 = por %p164, %p165
      %p167 = scmp.ne.s32.totalorder %s156, %s159
      %p168 = scmp.eq.s32.totalorder %s35, 3
      %p169 = por %p167, %p168
      %p170 = scmp.ne.s32.totalorder %s159, %s160
      %p171 = scmp.eq.s32.totalorder %s35, 0
      %p172 = por %p170, %p171
      %p173 = scmp.ne.s32.totalorder %s159, %s160
      %p174 = scmp.eq.s32.totalorder %s36, 3
      %p175 = por %p173, %p174
      %p177 = scmp.ne.s32.totalorder %s160, %s176
      %p178 = scmp.eq.s32.totalorder %s36, 0
      %p179 = por %p177, %p178
      %s180 = ssub.s32 %s38, %s45
      %p181 = scmp.eq.s32.totalorder %s180, 0
      %s183 = sadd.s32 %s182, 1
      %s184 = scalar_select %p181, %s182, %s183
      %p187 = pneg %p181
      %p188 = scmp.eq.s32.totalorder %s30, 3
      %p189 = por %p187, %p188
      %p190 = scmp.ne.s32.totalorder %s182, %s185
      %p191 = scmp.eq.s32.totalorder %s30, 0
      %p192 = por %p190, %p191
      %p193 = scmp.ne.s32.totalorder %s182, %s185
      %p194 = scmp.eq.s32.totalorder %s35, 3
      %p195 = por %p193, %p194
      %p196 = scmp.ne.s32.totalorder %s185, %s186
      %p197 = scmp.eq.s32.totalorder %s35, 0
      %p198 = por %p196, %p197
      %p199 = scmp.ne.s32.totalorder %s185, %s186
      %p200 = scmp.eq.s32.totalorder %s36, 3
      %p201 = por %p199, %p200
      %p203 = scmp.ne.s32.totalorder %s186, %s202
      %p204 = scmp.eq.s32.totalorder %s36, 0
      %p205 = por %p203, %p204
      %s206 = ssub.s32 %s38, %s45
      %p207 = scmp.eq.s32.totalorder %s206, 0
      %s209 = sadd.s32 %s208, 1
      %s210 = scalar_select %p207, %s208, %s209
      %p213 = pneg %p207
      %p214 = scmp.eq.s32.totalorder %s30, 3
      %p215 = por %p213, %p214
      %p216 = scmp.ne.s32.totalorder %s208, %s211
      %p217 = scmp.eq.s32.totalorder %s30, 0
      %p218 = por %p216, %p217
      %p219 = scmp.ne.s32.totalorder %s208, %s211
      %p220 = scmp.eq.s32.totalorder %s35, 3
      %p221 = por %p219, %p220
      %p222 = scmp.ne.s32.totalorder %s211, %s212
      %p223 = scmp.eq.s32.totalorder %s35, 0
      %p224 = por %p222, %p223
      %p225 = scmp.ne.s32.totalorder %s211, %s212
      %p226 = scmp.eq.s32.totalorder %s36, 3
      %p227 = por %p225, %p226
      %p229 = scmp.ne.s32.totalorder %s212, %s228
      %p230 = scmp.eq.s32.totalorder %s36, 0
      %p231 = por %p229, %p230
      %s232 = ssub.s32 %s38, %s45
      %p233 = scmp.eq.s32.totalorder %s232, 0
      %s235 = sadd.s32 %s234, 1
      %s236 = scalar_select %p233, %s234, %s235
      %p239 = pneg %p233
      %p240 = scmp.eq.s32.totalorder %s30, 3
      %p241 = por %p239, %p240
      %p242 = scmp.ne.s32.totalorder %s234, %s237
      %p243 = scmp.eq.s32.totalorder %s30, 0
      %p244 = por %p242, %p243
      %p245 = scmp.ne.s32.totalorder %s234, %s237
      %p246 = scmp.eq.s32.totalorder %s35, 3
      %p247 = por %p245, %p246
      %p248 = scmp.ne.s32.totalorder %s237, %s238
      %p249 = scmp.eq.s32.totalorder %s35, 0
      %p250 = por %p248, %p249
      %p251 = scmp.ne.s32.totalorder %s237, %s238
      %p252 = scmp.eq.s32.totalorder %s36, 3
      %p253 = por %p251, %p252
      %p255 = scmp.ne.s32.totalorder %s238, %s254
      %p256 = scmp.eq.s32.totalorder %s36, 0
      %p257 = por %p255, %p256
      %s258 = ssub.s32 %s38, %s45
      %p259 = scmp.eq.s32.totalorder %s258, 0
      %s261 = sadd.s32 %s260, 1
      %s262 = scalar_select %p259, %s260, %s261
      %p265 = pneg %p259
      %p266 = scmp.eq.s32.totalorder %s30, 3
      %p267 = por %p265, %p266
      %p268 = scmp.ne.s32.totalorder %s260, %s263
      %p269 = scmp.eq.s32.totalorder %s30, 0
      %p270 = por %p268, %p269
      %p271 = scmp.ne.s32.totalorder %s260, %s263
      %p272 = scmp.eq.s32.totalorder %s35, 3
      %p273 = por %p271, %p272
      %p274 = scmp.ne.s32.totalorder %s263, %s264
      %p275 = scmp.eq.s32.totalorder %s35, 0
      %p276 = por %p274, %p275
      %p277 = scmp.ne.s32.totalorder %s263, %s264
      %p278 = scmp.eq.s32.totalorder %s36, 3
      %p279 = por %p277, %p278
      %p281 = scmp.ne.s32.totalorder %s264, %s280
      %p282 = scmp.eq.s32.totalorder %s36, 0
      %p283 = por %p281, %p282
      %s284 = ssub.s32 %s38, %s45
      %p285 = scmp.eq.s32.totalorder %s284, 0
      %s287 = sadd.s32 %s286, 1
      %s288 = scalar_select %p285, %s286, %s287
      %p291 = pneg %p285
      %p292 = scmp.eq.s32.totalorder %s30, 3
      %p293 = por %p291, %p292
      %p294 = scmp.ne.s32.totalorder %s286, %s289
      %p295 = scmp.eq.s32.totalorder %s30, 0
      %p296 = por %p294, %p295
      %p297 = scmp.ne.s32.totalorder %s286, %s289
      %p298 = scmp.eq.s32.totalorder %s35, 3
      %p299 = por %p297, %p298
      %p300 = scmp.ne.s32.totalorder %s289, %s290
      %p301 = scmp.eq.s32.totalorder %s35, 0
      %p302 = por %p300, %p301
      %p303 = scmp.ne.s32.totalorder %s289, %s290
      %p304 = scmp.eq.s32.totalorder %s36, 3
      %p305 = por %p303, %p304
      %p307 = scmp.ne.s32.totalorder %s290, %s306
      %p308 = scmp.eq.s32.totalorder %s36, 0
      %p309 = por %p307, %p308
      %s310 = ssub.s32 %s38, %s45
      %p311 = scmp.eq.s32.totalorder %s310, 0
      %s313 = sadd.s32 %s312, 1
      %s314 = scalar_select %p311, %s312, %s313
      %p317 = pneg %p311
      %p318 = scmp.eq.s32.totalorder %s30, 3
      %p319 = por %p317, %p318
      %p320 = scmp.ne.s32.totalorder %s312, %s315
      %p321 = scmp.eq.s32.totalorder %s30, 0
      %p322 = por %p320, %p321
      %p323 = scmp.ne.s32.totalorder %s312, %s315
      %p324 = scmp.eq.s32.totalorder %s35, 3
      %p325 = por %p323, %p324
      %p326 = scmp.ne.s32.totalorder %s315, %s316
      %p327 = scmp.eq.s32.totalorder %s35, 0
      %p328 = por %p326, %p327
      %p329 = scmp.ne.s32.totalorder %s315, %s316
      %p330 = scmp.eq.s32.totalorder %s36, 3
      %p331 = por %p329, %p330
      %p333 = scmp.ne.s32.totalorder %s316, %s332
      %p334 = scmp.eq.s32.totalorder %s36, 0
      %p335 = por %p333, %p334
      %s336 = ssub.s32 %s38, %s45
      %p337 = scmp.eq.s32.totalorder %s336, 0
      %s339 = sadd.s32 %s338, 1
      %s340 = scalar_select %p337, %s338, %s339
      %p343 = pneg %p337
      %p344 = scmp.eq.s32.totalorder %s30, 3
      %p345 = por %p343, %p344
      %p346 = scmp.ne.s32.totalorder %s338, %s341
      %p347 = scmp.eq.s32.totalorder %s30, 0
      %p348 = por %p346, %p347
      %p349 = scmp.ne.s32.totalorder %s338, %s341
      %p350 = scmp.eq.s32.totalorder %s35, 3
      %p351 = por %p349, %p350
      %p352 = scmp.ne.s32.totalorder %s341, %s342
      %p353 = scmp.eq.s32.totalorder %s35, 0
      %p354 = por %p352, %p353
      %p355 = scmp.ne.s32.totalorder %s341, %s342
      %p356 = scmp.eq.s32.totalorder %s36, 3
      %p357 = por %p355, %p356
      %p359 = scmp.ne.s32.totalorder %s342, %s358
      %p360 = scmp.eq.s32.totalorder %s36, 0
      %p361 = por %p359, %p360
      %s362 = ssub.s32 %s38, %s45
      %p363 = scmp.eq.s32.totalorder %s362, 0
      %s365 = sadd.s32 %s364, 1
      %s366 = scalar_select %p363, %s364, %s365
      %p369 = pneg %p363
      %p370 = scmp.eq.s32.totalorder %s30, 3
      %p371 = por %p369, %p370
      %p372 = scmp.ne.s32.totalorder %s364, %s367
      %p373 = scmp.eq.s32.totalorder %s30, 0
      %p374 = por %p372, %p373
      %p375 = scmp.ne.s32.totalorder %s364, %s367
      %p376 = scmp.eq.s32.totalorder %s35, 3
      %p377 = por %p375, %p376
      %p378 = scmp.ne.s32.totalorder %s367, %s368
      %p379 = scmp.eq.s32.totalorder %s35, 0
      %p380 = por %p378, %p379
      %p381 = scmp.ne.s32.totalorder %s367, %s368
      %p382 = scmp.eq.s32.totalorder %s36, 3
      %p383 = por %p381, %p382
      %p385 = scmp.ne.s32.totalorder %s368, %s384
      %p386 = scmp.eq.s32.totalorder %s36, 0
      %p387 = por %p385, %p386
      %s388 = ssub.s32 %s37, %s49
      %p389 = scmp.eq.s32.totalorder %s388, 0
      %s391 = sadd.s32 %s390, 1
      %s392 = scalar_select %p389, %s390, %s391
      %p395 = pneg %p389
      %p396 = scmp.eq.s32.totalorder %s30, 3
      %p397 = por %p395, %p396
      %p398 = scmp.ne.s32.totalorder %s390, %s393
      %p399 = scmp.eq.s32.totalorder %s30, 0
      %p400 = por %p398, %p399
      %p401 = scmp.ne.s32.totalorder %s390, %s393
      %p402 = scmp.eq.s32.totalorder %s35, 3
      %p403 = por %p401, %p402
      %p404 = scmp.ne.s32.totalorder %s393, %s394
      %p405 = scmp.eq.s32.totalorder %s35, 0
      %p406 = por %p404, %p405
      %p407 = scmp.ne.s32.totalorder %s393, %s394
      %p408 = scmp.eq.s32.totalorder %s36, 3
      %p409 = por %p407, %p408
      %p411 = scmp.ne.s32.totalorder %s394, %s410
      %p412 = scmp.eq.s32.totalorder %s36, 0
      %p413 = por %p411, %p412
      %s414 = ssub.s32 %s38, %s45
      %s415 = ssub.s32 %s37, %s49
      %s416 = sor.u32 %s414, %s415
      %p417 = scmp.eq.s32.totalorder %s416, 0
      %s419 = sadd.s32 %s418, 1
      %s420 = scalar_select %p417, %s418, %s419
      %p423 = pneg %p417
      %p424 = scmp.eq.s32.totalorder %s30, 3
      %p425 = por %p423, %p424
      %p426 = scmp.ne.s32.totalorder %s418, %s421
      %p427 = scmp.eq.s32.totalorder %s30, 0
      %p428 = por %p426, %p427
      %p429 = scmp.ne.s32.totalorder %s418, %s421
      %p430 = scmp.eq.s32.totalorder %s35, 3
      %p431 = por %p429, %p430
      %p432 = scmp.ne.s32.totalorder %s421, %s422
      %p433 = scmp.eq.s32.totalorder %s35, 0
      %p434 = por %p432, %p433
      %p435 = scmp.ne.s32.totalorder %s421, %s422
      %p436 = scmp.eq.s32.totalorder %s36, 3
      %p437 = por %p435, %p436
      %p439 = scmp.ne.s32.totalorder %s422, %s438
      %p440 = scmp.eq.s32.totalorder %s36, 0
      %p441 = por %p439, %p440
      %p442 = scmp.le.s32.totalorder 1, %s30
      %p443 = scmp.lt.s32.totalorder %s30, 5
      %p444 = pnand %p442, %p443
      %p445 = pneg %p444
      // Predicated region
      $region9: #{tpu_custom_call.1} parent=5 // pred_check
        _
      $region10: #{tpu_custom_call.1} parent=5 // pred_check_branch
        %447 = sbr.rel (%p444) target = $region12
      $region11: #{tpu_custom_call.1} parent=5 // pred_region
        %s448 = ssub.s32 %s30, 1
      $region12: #{tpu_custom_call.1} parent=5 // pred_fallthru
        _
      %p449 = scmp.lt.s32.totalorder %s30, 4
      // Predicated region
      $region13: #{tpu_custom_call.1} parent=5 // pred_check
        %p450 = pneg %p449
      $region14: #{tpu_custom_call.1} parent=5 // pred_check_branch
        %452 = sbr.rel (%p450) target = $region16
      $region15: #{tpu_custom_call.1} parent=5 // pred_region
        // Predicated region
        $region17: #{tpu_custom_call.1} parent=15 // pred_check
          %p453 = pneg %p62
        $region18: #{tpu_custom_call.1} parent=15 // pred_check_branch
          %455 = sbr.rel (%p453) target = $region20
        $region19: #{tpu_custom_call.1} parent=15 // pred_region
          %s456 = sand.u32 %s52, 1
          %s457 = scalar_lea.sflag [#allocation3], %s456
          %s458 = sand.u32 %s52, 1
          %s459 = smul.addr %s458, 8
          %s460 = scalar_lea.vmem [#allocation2], %s459
          %s462 = ssub.s32 128, 128
          %463 = vsyncadd %s457, %s462
          %s464 = smul.addr %s37, 128
          %s465 = scalar_lea.hbm %s0, %s464
          %s467 = sshll.u32 %s460, 4
          %s468 = int_to_ptr.vmem [resolvable:$true] %s467
          %470 = dma.hbm_to_vmem [thread:$0]  %s465, 128, %s468, %s457
        $region20: #{tpu_custom_call.1} parent=15 // pred_fallthru
          _
        // Predicated region
        $region21: #{tpu_custom_call.1} parent=15 // pred_check
          %p471 = pneg %p88
        $region22: #{tpu_custom_call.1} parent=15 // pred_check_branch
          %473 = sbr.rel (%p471) target = $region24
        $region23: #{tpu_custom_call.1} parent=15 // pred_region
          %p474 = scmp.lt.s32.totalorder %s38, 1
          %s475 = scalar_select %p474, %s38, 1
          %s476 = smul.addr %s475, 4
          %s477 = smul.addr %s476, 4
          %s478 = scalar_lea.vmem %s1, %s477
        $region24: #{tpu_custom_call.1} parent=15 // pred_fallthru
          _
        // Predicated region
        $region25: #{tpu_custom_call.1} parent=15 // pred_check
          %p479 = pneg %p114
        $region26: #{tpu_custom_call.1} parent=15 // pred_check_branch
          %481 = sbr.rel (%p479) target = $region28
        $region27: #{tpu_custom_call.1} parent=15 // pred_region
          %p482 = scmp.lt.s32.totalorder %s38, 1
          %s483 = scalar_select %p482, %s38, 1
          %s484 = scalar_lea.vmem %s2, %s483
        $region28: #{tpu_custom_call.1} parent=15 // pred_fallthru
          _
        // Predicated region
        $region29: #{tpu_custom_call.1} parent=15 // pred_check
          %p485 = pneg %p140
        $region30: #{tpu_custom_call.1} parent=15 // pred_check_branch
          %487 = sbr.rel (%p485) target = $region32
        $region31: #{tpu_custom_call.1} parent=15 // pred_region
          %p488 = scmp.lt.s32.totalorder %s38, 1
          %s489 = scalar_select %p488, %s38, 1
          %s490 = smul.addr %s489, 4
          %s491 = smul.addr %s490, 4
          %s492 = scalar_lea.vmem %s3, %s491
        $region32: #{tpu_custom_call.1} parent=15 // pred_fallthru
          _
        // Predicated region
        $region33: #{tpu_custom_call.1} parent=15 // pred_check
          %p493 = pneg %p166
        $region34: #{tpu_custom_call.1} parent=15 // pred_check_branch
          %495 = sbr.rel (%p493) target = $region36
        $region35: #{tpu_custom_call.1} parent=15 // pred_region
          %p496 = scmp.lt.s32.totalorder %s38, 1
          %s497 = scalar_select %p496, %s38, 1
          %s498 = scalar_lea.vmem %s4, %s497
        $region36: #{tpu_custom_call.1} parent=15 // pred_fallthru
          _
        // Predicated region
        $region37: #{tpu_custom_call.1} parent=15 // pred_check
          %p499 = pneg %p192
        $region38: #{tpu_custom_call.1} parent=15 // pred_check_branch
          %501 = sbr.rel (%p499) target = $region40
        $region39: #{tpu_custom_call.1} parent=15 // pred_region
          %p502 = scmp.lt.s32.totalorder %s38, 1
          %s503 = scalar_select %p502, %s38, 1
          %s504 = smul.addr %s503, 4
          %s505 = smul.addr %s504, 4
          %s506 = scalar_lea.vmem %s5, %s505
        $region40: #{tpu_custom_call.1} parent=15 // pred_fallthru
          _
        // Predicated region
        $region41: #{tpu_custom_call.1} parent=15 // pred_check
          %p507 = pneg %p218
        $region42: #{tpu_custom_call.1} parent=15 // pred_check_branch
          %509 = sbr.rel (%p507) target = $region44
        $region43: #{tpu_custom_call.1} parent=15 // pred_region
          %p510 = scmp.lt.s32.totalorder %s38, 1
          %s511 = scalar_select %p510, %s38, 1
          %s512 = scalar_lea.vmem %s6, %s511
        $region44: #{tpu_custom_call.1} parent=15 // pred_fallthru
          _
        // Predicated region
        $region45: #{tpu_custom_call.1} parent=15 // pred_check
          %p513 = pneg %p244
        $region46: #{tpu_custom_call.1} parent=15 // pred_check_branch
          %515 = sbr.rel (%p513) target = $region48
        $region47: #{tpu_custom_call.1} parent=15 // pred_region
          %p516 = scmp.lt.s32.totalorder %s38, 1
          %s517 = scalar_select %p516, %s38, 1
          %s518 = smul.addr %s517, 8
          %s519 = smul.addr %s518, 4
          %s520 = scalar_lea.vmem %s7, %s519
        $region48: #{tpu_custom_call.1} parent=15 // pred_fallthru
          _
        // Predicated region
        $region49: #{tpu_custom_call.1} parent=15 // pred_check
          %p521 = pneg %p270
        $region50: #{tpu_custom_call.1} parent=15 // pred_check_branch
          %523 = sbr.rel (%p521) target = $region52
        $region51: #{tpu_custom_call.1} parent=15 // pred_region
          %p524 = scmp.lt.s32.totalorder %s38, 1
          %s525 = scalar_select %p524, %s38, 1
          %s526 = scalar_lea.vmem %s8, %s525
        $region52: #{tpu_custom_call.1} parent=15 // pred_fallthru
          _
        // Predicated region
        $region53: #{tpu_custom_call.1} parent=15 // pred_check
          %p527 = pneg %p296
        $region54: #{tpu_custom_call.1} parent=15 // pred_check_branch
          %529 = sbr.rel (%p527) target = $region56
        $region55: #{tpu_custom_call.1} parent=15 // pred_region
          %p530 = scmp.lt.s32.totalorder %s38, 1
          %s531 = scalar_select %p530, %s38, 1
          %s532 = scalar_lea.vmem %s9, %s531
        $region56: #{tpu_custom_call.1} parent=15 // pred_fallthru
          _
        // Predicated region
        $region57: #{tpu_custom_call.1} parent=15 // pred_check
          %p533 = pneg %p322
        $region58: #{tpu_custom_call.1} parent=15 // pred_check_branch
          %535 = sbr.rel (%p533) target = $region60
        $region59: #{tpu_custom_call.1} parent=15 // pred_region
          %p536 = scmp.lt.s32.totalorder %s38, 1
          %s537 = scalar_select %p536, %s38, 1
          %s538 = scalar_lea.vmem %s10, %s537
        $region60: #{tpu_custom_call.1} parent=15 // pred_fallthru
          _
        // Predicated region
        $region61: #{tpu_custom_call.1} parent=15 // pred_check
          %p539 = pneg %p348
        $region62: #{tpu_custom_call.1} parent=15 // pred_check_branch
          %541 = sbr.rel (%p539) target = $region64
        $region63: #{tpu_custom_call.1} parent=15 // pred_region
          %p542 = scmp.lt.s32.totalorder %s38, 1
          %s543 = scalar_select %p542, %s38, 1
          %s544 = scalar_lea.vmem %s11, %s543
        $region64: #{tpu_custom_call.1} parent=15 // pred_fallthru
          _
        // Predicated region
        $region65: #{tpu_custom_call.1} parent=15 // pred_check
          %p545 = pneg %p374
        $region66: #{tpu_custom_call.1} parent=15 // pred_check_branch
          %547 = sbr.rel (%p545) target = $region68
        $region67: #{tpu_custom_call.1} parent=15 // pred_region
          %p548 = scmp.lt.s32.totalorder %s38, 1
          %s549 = scalar_select %p548, %s38, 1
          %s550 = scalar_lea.vmem %s12, %s549
        $region68: #{tpu_custom_call.1} parent=15 // pred_fallthru
          _
      $region16: #{tpu_custom_call.1} parent=5 // pred_fallthru
        _
      %p551 = scmp.le.s32.totalorder 1, %s30
      %p552 = scmp.lt.s32.totalorder %s30, 5
      %p553 = pnand %p551, %p552
      %p554 = pneg %p553
      // Predicated region
      $region69: #{tpu_custom_call.1} parent=5 // pred_check
        _
      $region70: #{tpu_custom_call.1} parent=5 // pred_check_branch
        %556 = sbr.rel (%p553) target = $region72
      $region71: #{tpu_custom_call.1} parent=5 // pred_region
        %s557 = ssub.s32 %s30, 1
        %s558 = sand.u32 %s55, 1
        %s559 = scalar_lea.sflag [#allocation3], %s558
        %s560 = sand.u32 %s55, 1
        %s561 = smul.addr %s560, 8
        %s562 = scalar_lea.vmem [#allocation2], %s561
        // Predicated region
        $region73: #{tpu_custom_call.1} parent=71 // pred_check
          %p563 = pneg %p68
        $region74: #{tpu_custom_call.1} parent=71 // pred_check_branch
          %565 = sbr.rel (%p563) target = $region76
        $region75: #{tpu_custom_call.1} parent=71 // pred_region
          %566 = dma.done %s559, 128
        $region76: #{tpu_custom_call.1} parent=71 // pred_fallthru
          _
        %s567 = sand.u32 %s55, 1
        %s568 = scalar_lea.sflag [#allocation3], %s567
        %s569 = sand.u32 %s55, 1
        %s570 = smul.addr %s569, 8
        %s571 = scalar_lea.vmem [#allocation2], %s570
        %p572 = pneg %p68
        %p573 = pneg %p65
        %p574 = scmp.lt.s32.totalorder %s40, 1
        %s575 = scalar_select %p574, %s40, 1
        %s576 = smul.addr %s575, 4
        %s577 = smul.addr %s576, 4
        %s578 = scalar_lea.vmem %s1, %s577
        %p579 = pneg %p94
        %p580 = pneg %p91
        %p581 = scmp.lt.s32.totalorder %s40, 1
        %s582 = scalar_select %p581, %s40, 1
        %s583 = scalar_lea.vmem %s2, %s582
        %p584 = pneg %p120
        %p585 = pneg %p117
        %p586 = scmp.lt.s32.totalorder %s40, 1
        %s587 = scalar_select %p586, %s40, 1
        %s588 = smul.addr %s587, 4
        %s589 = smul.addr %s588, 4
        %s590 = scalar_lea.vmem %s3, %s589
        %p591 = pneg %p146
        %p592 = pneg %p143
        %p593 = scmp.lt.s32.totalorder %s40, 1
        %s594 = scalar_select %p593, %s40, 1
        %s595 = scalar_lea.vmem %s4, %s594
        %p596 = pneg %p172
        %p597 = pneg %p169
        %p598 = scmp.lt.s32.totalorder %s40, 1
        %s599 = scalar_select %p598, %s40, 1
        %s600 = smul.addr %s599, 4
        %s601 = smul.addr %s600, 4
        %s602 = scalar_lea.vmem %s5, %s601
        %p603 = pneg %p198
        %p604 = pneg %p195
        %p605 = scmp.lt.s32.totalorder %s40, 1
        %s606 = scalar_select %p605, %s40, 1
        %s607 = scalar_lea.vmem %s6, %s606
        %p608 = pneg %p224
        %p609 = pneg %p221
        %p610 = scmp.lt.s32.totalorder %s40, 1
        %s611 = scalar_select %p610, %s40, 1
        %s612 = smul.addr %s611, 8
        %s613 = smul.addr %s612, 4
        %s614 = scalar_lea.vmem %s7, %s613
        %p615 = pneg %p250
        %p616 = pneg %p247
        %p617 = scmp.lt.s32.totalorder %s40, 1
        %s618 = scalar_select %p617, %s40, 1
        %s619 = scalar_lea.vmem %s8, %s618
        %p620 = pneg %p276
        %p621 = pneg %p273
        %p622 = scmp.lt.s32.totalorder %s40, 1
        %s623 = scalar_select %p622, %s40, 1
        %s624 = scalar_lea.vmem %s9, %s623
        %p625 = pneg %p302
        %p626 = pneg %p299
        %p627 = scmp.lt.s32.totalorder %s40, 1
        %s628 = scalar_select %p627, %s40, 1
        %s629 = scalar_lea.vmem %s10, %s628
        %p630 = pneg %p328
        %p631 = pneg %p325
        %p632 = scmp.lt.s32.totalorder %s40, 1
        %s633 = scalar_select %p632, %s40, 1
        %s634 = scalar_lea.vmem %s11, %s633
        %p635 = pneg %p354
        %p636 = pneg %p351
        %p637 = scmp.lt.s32.totalorder %s40, 1
        %s638 = scalar_select %p637, %s40, 1
        %s639 = scalar_lea.vmem %s12, %s638
        %p640 = pneg %p380
        %p641 = pneg %p377
        %p642 = pneg %p406
        %p643 = pneg %p403
        %s644 = sand.u32 %s393, 1
        %s645 = scalar_lea.sflag [#allocation4], %s644
        %s646 = sand.u32 %s393, 1
        %s647 = smul.addr %s646, 8
        %s648 = scalar_lea.vmem [#allocation5], %s647
        %p649 = pneg %p434
        %p650 = pneg %p431
        %s651 = sand.u32 %s421, 1
        %s652 = scalar_lea.sflag [#allocation7], %s651
        %s653 = sand.u32 %s421, 1
        %s654 = scalar_lea.vmem [#allocation6], %s653
        %p655 = scmp.lt.s32.totalorder %s40, 1
        %s656 = scalar_select %p655, %s40, 1
        %s657 = smul.addr %s656, 4
        %s658 = smul.addr %s657, 4
        %s659 = scalar_lea.vmem %s1, %s658
        %p660 = scmp.lt.s32.totalorder %s40, 1
        %s661 = scalar_select %p660, %s40, 1
        %s662 = scalar_lea.vmem %s2, %s661
        %p663 = scmp.lt.s32.totalorder %s40, 1
        %s664 = scalar_select %p663, %s40, 1
        %s665 = smul.addr %s664, 4
        %s666 = smul.addr %s665, 4
        %s667 = scalar_lea.vmem %s3, %s666
        %p668 = scmp.lt.s32.totalorder %s40, 1
        %s669 = scalar_select %p668, %s40, 1
        %s670 = scalar_lea.vmem %s4, %s669
        %p671 = scmp.lt.s32.totalorder %s40, 1
        %s672 = scalar_select %p671, %s40, 1
        %s673 = smul.addr %s672, 4
        %s674 = smul.addr %s673, 4
        %s675 = scalar_lea.vmem %s5, %s674
        %p676 = scmp.lt.s32.totalorder %s40, 1
        %s677 = scalar_select %p676, %s40, 1
        %s678 = scalar_lea.vmem %s6, %s677
        %p679 = scmp.lt.s32.totalorder %s40, 1
        %s680 = scalar_select %p679, %s40, 1
        %s681 = smul.addr %s680, 8
        %s682 = smul.addr %s681, 4
        %s683 = scalar_lea.vmem %s7, %s682
        %p684 = scmp.lt.s32.totalorder %s40, 1
        %s685 = scalar_select %p684, %s40, 1
        %s686 = scalar_lea.vmem %s8, %s685
        %p687 = scmp.lt.s32.totalorder %s40, 1
        %s688 = scalar_select %p687, %s40, 1
        %s689 = scalar_lea.vmem %s9, %s688
        %p690 = scmp.lt.s32.totalorder %s40, 1
        %s691 = scalar_select %p690, %s40, 1
        %s692 = scalar_lea.vmem %s10, %s691
        %p693 = scmp.lt.s32.totalorder %s40, 1
        %s694 = scalar_select %p693, %s40, 1
        %s695 = scalar_lea.vmem %s11, %s694
        %p696 = scmp.lt.s32.totalorder %s40, 1
        %s697 = scalar_select %p696, %s40, 1
        %s698 = scalar_lea.vmem %s12, %s697
        %p700 = scmp.eq.s32.totalorder %s40, 0
        // Predicated region
        $region77: #{tpu_custom_call.1} parent=71 // pred_check
          %p701 = pneg %p700
        $region78: #{tpu_custom_call.1} parent=71 // pred_check_branch
          %703 = sbr.rel (%p701) target = $region80
        $region79: #{tpu_custom_call.1} parent=71 // pred_region
          %v704 = vld [vmem:[%s562] sm:$0xff]
          %vm705 = vcmask 261120
          %706 = vst.msk [vmem:[%s648] sm:$0xff] %vm705, %v704
        $region80: #{tpu_custom_call.1} parent=71 // pred_fallthru
          _
        %v707 = vld [vmem:[%s648] sm:$0xff]
        %v708 = vpack.c.bf16 %v707, %v707
        %v709 = vld [vmem:[%s659] sm:$0xf]
        %v710 = vld [vmem:[%s659 + $0x4] sm:$0xf]
        %v711 = vld [vmem:[%s659 + $0x8] sm:$0xf]
        %v712 = vld [vmem:[%s659 + $0xc] sm:$0xf]
        %v713 = vld [vmem:[%s662] sm:$0x1]
        %v715 = vlaneseq
        %v716 = vshrl.u32 %v715, 7
        %v717 = vsub.s32 0, %v716
        %v718 = vrot.slane %v713, %v717
        %v724 = vunpack.c.l.b16 %v709
        %v725 = vunpack.c.l.b16 %v710
        %v726 = vunpack.c.l.b16 %v711
        %v727 = vunpack.c.l.b16 %v712
        %v728 = vpack.c.b16 %v725, %v724
        %v729 = vpack.c.b16 %v727, %v726
        %vm732 = vcmask 261120
        %v734 = vsel %vm732, %v708, 0
        %736 = vmatprep.subr.bf16.mxu0 0
        %737 = vmatpush1.bf16.msra.mxu0 0
        %738 = vmatprep.subr.bf16.mxu0 0
        %739 = vmatpush1.bf16.msra.mxu0 0
        %740 = vmatprep.subr.bf16.mxu0 0
        %741 = vmatpush1.bf16.msra.mxu0 0
        %742 = vmatprep.subr.bf16.mxu0 0
        %743 = vmatpush1.bf16.msra.mxu0 0
        %744 = vmatprep.subr.bf16.mxu0 0
        %745 = vmatpush1.bf16.msra.mxu0 0
        %746 = vmatprep.subr.bf16.mxu0 0
        %747 = vmatpush1.bf16.msra.mxu0 0
        %748 = vmatprep.subr.bf16.mxu0 0
        %749 = vmatpush1.bf16.msra.mxu0 %v729
        %750 = vmatprep.subr.bf16.mxu0 0
        %751 = vmatpush1.bf16.msra.mxu0 %v728
        %752 = vmatprep.subr.bf16.mxu0 0
        %753 = vmatpush2.bf16.msra.mxu0 0
        %754 = vmatprep.subr.bf16.mxu0 0
        %755 = vmatpush2.bf16.msra.mxu0 0
        %756 = vmatprep.subr.bf16.mxu0 0
        %757 = vmatpush2.bf16.msra.mxu0 0
        %758 = vmatprep.subr.bf16.mxu0 0
        %759 = vmatpush2.bf16.msra.mxu0 0
        %760 = vmatprep.subr.bf16.mxu0 0
        %761 = vmatpush2.bf16.msra.mxu0 0
        %762 = vmatprep.subr.bf16.mxu0 0
        %763 = vmatpush2.bf16.msra.mxu0 0
        %764 = vmatprep.subr.bf16.mxu0 0
        %765 = vmatpush2.bf16.msra.mxu0 0
        %766 = vmatprep.subr.bf16.mxu0 0
        %767 = vmatpush2.bf16.msra.mxu0 0
        %768 = vmatprep.mubr.bf16.mxu0 0
        %769 = vmatmul.mubr.bf16.gmra.mxu0 %v734
        %v770 = vpop.f32.mrf.mxu0
        %v771 = vadd.f32 %v718, %v770
        %v772 = vpop.f32.mrf.mxu0
        %v773 = vpop.f32.mrf.mxu0
        %v774 = vpop.f32.mrf.mxu0
        %775 = vdwg.mxu0
        %v776 = vpack.c.bf16 %v771, %v771
        %778 = vrot.lane.b32.xlu0 %v776, 96
        %v779 = vpop.permute.xlu0 %778
        %vm780 = vcmask 64512
        %v782 = vsel %vm780, %v776, 0
        %v785 = vsel %vm780, %v779, 0
        %787 = vmatprep.subr.bf16.mxu0 0
        %788 = vmatpush1.bf16.xpose.msra.mxu0 0
        %789 = vmatprep.subr.bf16.mxu0 0
        %790 = vmatpush1.bf16.xpose.msra.mxu0 0
        %791 = vmatprep.subr.bf16.mxu0 0
        %792 = vmatpush1.bf16.xpose.msra.mxu0 0
        %793 = vmatprep.subr.bf16.mxu0 0
        %794 = vmatpush1.bf16.xpose.msra.mxu0 0
        %795 = vmatprep.subr.bf16.mxu0 0
        %796 = vmatpush1.bf16.xpose.msra.mxu0 0
        %797 = vmatprep.subr.bf16.mxu0 0
        %798 = vmatpush1.bf16.xpose.msra.mxu0 0
        %799 = vmatprep.subr.bf16.mxu0 0
        %800 = vmatpush1.bf16.xpose.msra.mxu0 0
        %801 = vmatprep.subr.bf16.mxu0 0
        %802 = vmatpush1.bf16.xpose.msra.mxu0 %v785
        %803 = vmatprep.subr.bf16.mxu0 0
        %804 = vmatpush2.bf16.xpose.msra.mxu0 0
        %805 = vmatprep.subr.bf16.mxu0 0
        %806 = vmatpush2.bf16.xpose.msra.mxu0 0
        %807 = vmatprep.subr.bf16.mxu0 0
        %808 = vmatpush2.bf16.xpose.msra.mxu0 0
        %809 = vmatprep.subr.bf16.mxu0 0
        %810 = vmatpush2.bf16.xpose.msra.mxu0 0
        %811 = vmatprep.subr.bf16.mxu0 0
        %812 = vmatpush2.bf16.xpose.msra.mxu0 0
        %813 = vmatprep.subr.bf16.mxu0 0
        %814 = vmatpush2.bf16.xpose.msra.mxu0 0
        %815 = vmatprep.subr.bf16.mxu0 0
        %816 = vmatpush2.bf16.xpose.msra.mxu0 0
        %817 = vmatprep.subr.bf16.mxu0 0
        %818 = vmatpush2.bf16.xpose.msra.mxu0 0
        %819 = vmatprep.mubr.bf16.mxu0 0
        %820 = vmatmul.mubr.bf16.gmra.mxu0 %v782
        %v821 = vpop.f32.mrf.mxu0
        %v822 = vadd.f32 0.0, %v821
        %v823 = vpop.f32.mrf.mxu0
        %v824 = vpop.f32.mrf.mxu0
        %v825 = vpop.f32.mrf.mxu0
        %826 = vdwg.mxu0
        %v827 = vsel %vm780, %v822, -inf
        %828 = vmax.xlane.f32.xlu0 %v827
        %v829 = vpop.xlane.xlu0 %828
        %v830 = vsub.f32 %v822, %v829
        %v831 = vmul.f32 %v830, 1.442695
        %v832 = vpow.pop %v831
        %v833 = vsel %vm780, %v832, 0.0
        %834 = vadd.xlane.f32.xlu0 %v833
        %v835 = vpop.xlane.xlu0 %834
        %v836 = vrcp.pop %v835
        %v837 = vmul.f32 %v832, %v836
        %v838 = vadd.f32 %v837, 0.0
        %v839 = vpack.c.bf16 %v837, %v837
        %840 = vrot.lane.b32.xlu0 %v776, 64
        %v841 = vpop.permute.xlu0 %840
        %v843 = vsel %vm780, %v839, 0
        %vm845 = vcmask 1043456
        %v847 = vsel %vm845, %v841, 0
        %849 = vmatprep.subr.bf16.mxu0 0
        %850 = vmatpush1.bf16.msra.mxu0 0
        %851 = vmatprep.subr.bf16.mxu0 0
        %852 = vmatpush1.bf16.msra.mxu0 0
        %853 = vmatprep.subr.bf16.mxu0 0
        %854 = vmatpush1.bf16.msra.mxu0 0
        %855 = vmatprep.subr.bf16.mxu0 0
        %856 = vmatpush1.bf16.msra.mxu0 0
        %857 = vmatprep.subr.bf16.mxu0 0
        %858 = vmatpush1.bf16.msra.mxu0 0
        %859 = vmatprep.subr.bf16.mxu0 0
        %860 = vmatpush1.bf16.msra.mxu0 0
        %861 = vmatprep.subr.bf16.mxu0 0
        %862 = vmatpush1.bf16.msra.mxu0 0
        %863 = vmatprep.subr.bf16.mxu0 0
        %864 = vmatpush1.bf16.msra.mxu0 %v847
        %865 = vmatprep.subr.bf16.mxu0 0
        %866 = vmatpush2.bf16.msra.mxu0 0
        %867 = vmatprep.subr.bf16.mxu0 0
        %868 = vmatpush2.bf16.msra.mxu0 0
        %869 = vmatprep.subr.bf16.mxu0 0
        %870 = vmatpush2.bf16.msra.mxu0 0
        %871 = vmatprep.subr.bf16.mxu0 0
        %872 = vmatpush2.bf16.msra.mxu0 0
        %873 = vmatprep.subr.bf16.mxu0 0
        %874 = vmatpush2.bf16.msra.mxu0 0
        %875 = vmatprep.subr.bf16.mxu0 0
        %876 = vmatpush2.bf16.msra.mxu0 0
        %877 = vmatprep.subr.bf16.mxu0 0
        %878 = vmatpush2.bf16.msra.mxu0 0
        %879 = vmatprep.subr.bf16.mxu0 0
        %880 = vmatpush2.bf16.msra.mxu0 0
        %881 = vmatprep.mubr.bf16.mxu0 0
        %882 = vmatmul.mubr.bf16.gmra.mxu0 %v843
        %v883 = vpop.f32.mrf.mxu0
        %v884 = vadd.f32 0.0, %v883
        %v885 = vpop.f32.mrf.mxu0
        %v886 = vpop.f32.mrf.mxu0
        %v887 = vpop.f32.mrf.mxu0
        %888 = vdwg.mxu0
        %v889 = vpack.c.bf16 %v884, %v884
        %v890 = vld [vmem:[%s667] sm:$0xf]
        %891 = vrot.lane.b32.xlu0 %v776, 120
        %v892 = vpop.permute.xlu0 %891
        %893 = vrot.lane.b32.xlu0 %v776, 88
        %v894 = vpop.permute.xlu0 %893
        %v896 = vsel %vm780, %v892, 0
        %v899 = vsel %vm780, %v894, 0
        %901 = vmatprep.subr.bf16.mxu0 0
        %902 = vmatpush1.bf16.xpose.msra.mxu0 0
        %903 = vmatprep.subr.bf16.mxu0 0
        %904 = vmatpush1.bf16.xpose.msra.mxu0 0
        %905 = vmatprep.subr.bf16.mxu0 0
        %906 = vmatpush1.bf16.xpose.msra.mxu0 0
        %907 = vmatprep.subr.bf16.mxu0 0
        %908 = vmatpush1.bf16.xpose.msra.mxu0 0
        %909 = vmatprep.subr.bf16.mxu0 0
        %910 = vmatpush1.bf16.xpose.msra.mxu0 0
        %911 = vmatprep.subr.bf16.mxu0 0
        %912 = vmatpush1.bf16.xpose.msra.mxu0 0
        %913 = vmatprep.subr.bf16.mxu0 0
        %914 = vmatpush1.bf16.xpose.msra.mxu0 0
        %915 = vmatprep.subr.bf16.mxu0 0
        %916 = vmatpush1.bf16.xpose.msra.mxu0 %v899
        %917 = vmatprep.subr.bf16.mxu0 0
        %918 = vmatpush2.bf16.xpose.msra.mxu0 0
        %919 = vmatprep.subr.bf16.mxu0 0
        %920 = vmatpush2.bf16.xpose.msra.mxu0 0
        %921 = vmatprep.subr.bf16.mxu0 0
        %922 = vmatpush2.bf16.xpose.msra.mxu0 0
        %923 = vmatprep.subr.bf16.mxu0 0
        %924 = vmatpush2.bf16.xpose.msra.mxu0 0
        %925 = vmatprep.subr.bf16.mxu0 0
        %926 = vmatpush2.bf16.xpose.msra.mxu0 0
        %927 = vmatprep.subr.bf16.mxu0 0
        %928 = vmatpush2.bf16.xpose.msra.mxu0 0
        %929 = vmatprep.subr.bf16.mxu0 0
        %930 = vmatpush2.bf16.xpose.msra.mxu0 0
        %931 = vmatprep.subr.bf16.mxu0 0
        %932 = vmatpush2.bf16.xpose.msra.mxu0 0
        %933 = vmatprep.mubr.bf16.mxu0 0
        %934 = vmatmul.mubr.bf16.gmra.mxu0 %v896
        %v935 = vpop.f32.mrf.mxu0
        %v936 = vadd.f32 0.0, %v935
        %v937 = vpop.f32.mrf.mxu0
        %v938 = vpop.f32.mrf.mxu0
        %v939 = vpop.f32.mrf.mxu0
        %940 = vdwg.mxu0
        %v941 = vsel %vm780, %v936, -inf
        %942 = vmax.xlane.f32.xlu0 %v941
        %v943 = vpop.xlane.xlu0 %942
        %v944 = vsub.f32 %v936, %v943
        %v945 = vmul.f32 %v944, 1.442695
        %v946 = vpow.pop %v945
        %v947 = vsel %vm780, %v946, 0.0
        %948 = vadd.xlane.f32.xlu0 %v947
        %v949 = vpop.xlane.xlu0 %948
        %v950 = vrcp.pop %v949
        %v951 = vmul.f32 %v946, %v950
        %v952 = vadd.f32 %v838, %v951
        %v953 = vpack.c.bf16 %v951, %v951
        %954 = vrot.lane.b32.xlu0 %v776, 56
        %v955 = vpop.permute.xlu0 %954
        %v957 = vsel %vm780, %v953, 0
        %v960 = vsel %vm845, %v955, 0
        %962 = vmatprep.subr.bf16.mxu0 0
        %963 = vmatpush1.bf16.msra.mxu0 0
        %964 = vmatprep.subr.bf16.mxu0 0
        %965 = vmatpush1.bf16.msra.mxu0 0
        %966 = vmatprep.subr.bf16.mxu0 0
        %967 = vmatpush1.bf16.msra.mxu0 0
        %968 = vmatprep.subr.bf16.mxu0 0
        %969 = vmatpush1.bf16.msra.mxu0 0
        %970 = vmatprep.subr.bf16.mxu0 0
        %971 = vmatpush1.bf16.msra.mxu0 0
        %972 = vmatprep.subr.bf16.mxu0 0
        %973 = vmatpush1.bf16.msra.mxu0 0
        %974 = vmatprep.subr.bf16.mxu0 0
        %975 = vmatpush1.bf16.msra.mxu0 0
        %976 = vmatprep.subr.bf16.mxu0 0
        %977 = vmatpush1.bf16.msra.mxu0 %v960
        %978 = vmatprep.subr.bf16.mxu0 0
        %979 = vmatpush2.bf16.msra.mxu0 0
        %980 = vmatprep.subr.bf16.mxu0 0
        %981 = vmatpush2.bf16.msra.mxu0 0
        %982 = vmatprep.subr.bf16.mxu0 0
        %983 = vmatpush2.bf16.msra.mxu0 0
        %984 = vmatprep.subr.bf16.mxu0 0
        %985 = vmatpush2.bf16.msra.mxu0 0
        %986 = vmatprep.subr.bf16.mxu0 0
        %987 = vmatpush2.bf16.msra.mxu0 0
        %988 = vmatprep.subr.bf16.mxu0 0
        %989 = vmatpush2.bf16.msra.mxu0 0
        %990 = vmatprep.subr.bf16.mxu0 0
        %991 = vmatpush2.bf16.msra.mxu0 0
        %992 = vmatprep.subr.bf16.mxu0 0
        %993 = vmatpush2.bf16.msra.mxu0 0
        %994 = vmatprep.mubr.bf16.mxu0 0
        %995 = vmatmul.mubr.bf16.gmra.mxu0 %v957
        %v996 = vpop.f32.mrf.mxu0
        %v997 = vadd.f32 0.0, %v996
        %v998 = vpop.f32.mrf.mxu0
        %v999 = vpop.f32.mrf.mxu0
        %v1000 = vpop.f32.mrf.mxu0
        %1001 = vdwg.mxu0
        %v1002 = vpack.c.bf16 %v997, %v997
        %s1003 = scalar_lea.vmem %s667, 4
        %v1004 = vld [vmem:[%s1003] sm:$0xf]
        %v1006 = vsel %vm780, %v1002, 0
        %v1009 = vsel %vm845, %v1004, 0
        %1011 = vmatprep.subr.bf16.mxu0 0
        %1012 = vmatpush1.bf16.msra.mxu0 0
        %1013 = vmatprep.subr.bf16.mxu0 0
        %1014 = vmatpush1.bf16.msra.mxu0 0
        %1015 = vmatprep.subr.bf16.mxu0 0
        %1016 = vmatpush1.bf16.msra.mxu0 0
        %1017 = vmatprep.subr.bf16.mxu0 0
        %1018 = vmatpush1.bf16.msra.mxu0 0
        %1019 = vmatprep.subr.bf16.mxu0 0
        %1020 = vmatpush1.bf16.msra.mxu0 0
        %1021 = vmatprep.subr.bf16.mxu0 0
        %1022 = vmatpush1.bf16.msra.mxu0 0
        %1023 = vmatprep.subr.bf16.mxu0 0
        %1024 = vmatpush1.bf16.msra.mxu0 0
        %1025 = vmatprep.subr.bf16.mxu0 0
        %1026 = vmatpush1.bf16.msra.mxu0 %v1009
        %1027 = vmatprep.subr.bf16.mxu0 0
        %1028 = vmatpush2.bf16.msra.mxu0 0
        %1029 = vmatprep.subr.bf16.mxu0 0
        %1030 = vmatpush2.bf16.msra.mxu0 0
        %1031 = vmatprep.subr.bf16.mxu0 0
        %1032 = vmatpush2.bf16.msra.mxu0 0
        %1033 = vmatprep.subr.bf16.mxu0 0
        %1034 = vmatpush2.bf16.msra.mxu0 0
        %1035 = vmatprep.subr.bf16.mxu0 0
        %1036 = vmatpush2.bf16.msra.mxu0 0
        %1037 = vmatprep.subr.bf16.mxu0 0
        %1038 = vmatpush2.bf16.msra.mxu0 0
        %1039 = vmatprep.subr.bf16.mxu0 0
        %1040 = vmatpush2.bf16.msra.mxu0 0
        %1041 = vmatprep.subr.bf16.mxu0 0
        %1042 = vmatpush2.bf16.msra.mxu0 0
        %1043 = vmatprep.mubr.bf16.mxu0 0
        %1044 = vmatmul.mubr.bf16.gmra.mxu0 %v1006
        %v1045 = vpop.f32.mrf.mxu0
        %v1046 = vadd.f32 0.0, %v1045
        %v1047 = vpop.f32.mrf.mxu0
        %v1048 = vpop.f32.mrf.mxu0
        %v1049 = vpop.f32.mrf.mxu0
        %1050 = vdwg.mxu0
        %v1052 = vsel %vm780, %v889, 0
        %v1055 = vsel %vm845, %v890, 0
        %1057 = vmatprep.subr.bf16.mxu0 0
        %1058 = vmatpush1.bf16.msra.mxu0 0
        %1059 = vmatprep.subr.bf16.mxu0 0
        %1060 = vmatpush1.bf16.msra.mxu0 0
        %1061 = vmatprep.subr.bf16.mxu0 0
        %1062 = vmatpush1.bf16.msra.mxu0 0
        %1063 = vmatprep.subr.bf16.mxu0 0
        %1064 = vmatpush1.bf16.msra.mxu0 0
        %1065 = vmatprep.subr.bf16.mxu0 0
        %1066 = vmatpush1.bf16.msra.mxu0 0
        %1067 = vmatprep.subr.bf16.mxu0 0
        %1068 = vmatpush1.bf16.msra.mxu0 0
        %1069 = vmatprep.subr.bf16.mxu0 0
        %1070 = vmatpush1.bf16.msra.mxu0 0
        %1071 = vmatprep.subr.bf16.mxu0 0
        %1072 = vmatpush1.bf16.msra.mxu0 %v1055
        %1073 = vmatprep.subr.bf16.mxu0 0
        %1074 = vmatpush2.bf16.msra.mxu0 0
        %1075 = vmatprep.subr.bf16.mxu0 0
        %1076 = vmatpush2.bf16.msra.mxu0 0
        %1077 = vmatprep.subr.bf16.mxu0 0
        %1078 = vmatpush2.bf16.msra.mxu0 0
        %1079 = vmatprep.subr.bf16.mxu0 0
        %1080 = vmatpush2.bf16.msra.mxu0 0
        %1081 = vmatprep.subr.bf16.mxu0 0
        %1082 = vmatpush2.bf16.msra.mxu0 0
        %1083 = vmatprep.subr.bf16.mxu0 0
        %1084 = vmatpush2.bf16.msra.mxu0 0
        %1085 = vmatprep.subr.bf16.mxu0 0
        %1086 = vmatpush2.bf16.msra.mxu0 0
        %1087 = vmatprep.subr.bf16.mxu0 0
        %1088 = vmatpush2.bf16.msra.mxu0 0
        %1089 = vmatprep.mubr.bf16.mxu0 0
        %1090 = vmatmul.mubr.bf16.gmra.mxu0 %v1052
        %v1091 = vpop.f32.mrf.mxu0
        %v1092 = vadd.f32 %v1046, %v1091
        %v1093 = vpop.f32.mrf.mxu0
        %v1094 = vpop.f32.mrf.mxu0
        %v1095 = vpop.f32.mrf.mxu0
        %1096 = vdwg.mxu0
        %1097 = vrot.lane.b32.xlu0 %v776, 112
        %v1098 = vpop.permute.xlu0 %1097
        %1099 = vrot.lane.b32.xlu0 %v776, 80
        %v1100 = vpop.permute.xlu0 %1099
        %v1102 = vsel %vm780, %v1098, 0
        %v1105 = vsel %vm780, %v1100, 0
        %1107 = vmatprep.subr.bf16.mxu0 0
        %1108 = vmatpush1.bf16.xpose.msra.mxu0 0
        %1109 = vmatprep.subr.bf16.mxu0 0
        %1110 = vmatpush1.bf16.xpose.msra.mxu0 0
        %1111 = vmatprep.subr.bf16.mxu0 0
        %1112 = vmatpush1.bf16.xpose.msra.mxu0 0
        %1113 = vmatprep.subr.bf16.mxu0 0
        %1114 = vmatpush1.bf16.xpose.msra.mxu0 0
        %1115 = vmatprep.subr.bf16.mxu0 0
        %1116 = vmatpush1.bf16.xpose.msra.mxu0 0
        %1117 = vmatprep.subr.bf16.mxu0 0
        %1118 = vmatpush1.bf16.xpose.msra.mxu0 0
        %1119 = vmatprep.subr.bf16.mxu0 0
        %1120 = vmatpush1.bf16.xpose.msra.mxu0 0
        %1121 = vmatprep.subr.bf16.mxu0 0
        %1122 = vmatpush1.bf16.xpose.msra.mxu0 %v1105
        %1123 = vmatprep.subr.bf16.mxu0 0
        %1124 = vmatpush2.bf16.xpose.msra.mxu0 0
        %1125 = vmatprep.subr.bf16.mxu0 0
        %1126 = vmatpush2.bf16.xpose.msra.mxu0 0
        %1127 = vmatprep.subr.bf16.mxu0 0
        %1128 = vmatpush2.bf16.xpose.msra.mxu0 0
        %1129 = vmatprep.subr.bf16.mxu0 0
        %1130 = vmatpush2.bf16.xpose.msra.mxu0 0
        %1131 = vmatprep.subr.bf16.mxu0 0
        %1132 = vmatpush2.bf16.xpose.msra.mxu0 0
        %1133 = vmatprep.subr.bf16.mxu0 0
        %1134 = vmatpush2.bf16.xpose.msra.mxu0 0
        %1135 = vmatprep.subr.bf16.mxu0 0
        %1136 = vmatpush2.bf16.xpose.msra.mxu0 0
        %1137 = vmatprep.subr.bf16.mxu0 0
        %1138 = vmatpush2.bf16.xpose.msra.mxu0 0
        %1139 = vmatprep.mubr.bf16.mxu0 0
        %1140 = vmatmul.mubr.bf16.gmra.mxu0 %v1102
        %v1141 = vpop.f32.mrf.mxu0
        %v1142 = vadd.f32 0.0, %v1141
        %v1143 = vpop.f32.mrf.mxu0
        %v1144 = vpop.f32.mrf.mxu0
        %v1145 = vpop.f32.mrf.mxu0
        %1146 = vdwg.mxu0
        %v1147 = vsel %vm780, %v1142, -inf
        %1148 = vmax.xlane.f32.xlu0 %v1147
        %v1149 = vpop.xlane.xlu0 %1148
        %v1150 = vsub.f32 %v1142, %v1149
        %v1151 = vmul.f32 %v1150, 1.442695
        %v1152 = vpow.pop %v1151
        %v1153 = vsel %vm780, %v1152, 0.0
        %1154 = vadd.xlane.f32.xlu0 %v1153
        %v1155 = vpop.xlane.xlu0 %1154
        %v1156 = vrcp.pop %v1155
        %v1157 = vmul.f32 %v1152, %v1156
        %v1158 = vadd.f32 %v952, %v1157
        %v1159 = vpack.c.bf16 %v1157, %v1157
        %1160 = vrot.lane.b32.xlu0 %v776, 48
        %v1161 = vpop.permute.xlu0 %1160
        %v1163 = vsel %vm780, %v1159, 0
        %v1166 = vsel %vm845, %v1161, 0
        %1168 = vmatprep.subr.bf16.mxu0 0
        %1169 = vmatpush1.bf16.msra.mxu0 0
        %1170 = vmatprep.subr.bf16.mxu0 0
        %1171 = vmatpush1.bf16.msra.mxu0 0
        %1172 = vmatprep.subr.bf16.mxu0 0
        %1173 = vmatpush1.bf16.msra.mxu0 0
        %1174 = vmatprep.subr.bf16.mxu0 0
        %1175 = vmatpush1.bf16.msra.mxu0 0
        %1176 = vmatprep.subr.bf16.mxu0 0
        %1177 = vmatpush1.bf16.msra.mxu0 0
        %1178 = vmatprep.subr.bf16.mxu0 0
        %1179 = vmatpush1.bf16.msra.mxu0 0
        %1180 = vmatprep.subr.bf16.mxu0 0
        %1181 = vmatpush1.bf16.msra.mxu0 0
        %1182 = vmatprep.subr.bf16.mxu0 0
        %1183 = vmatpush1.bf16.msra.mxu0 %v1166
        %1184 = vmatprep.subr.bf16.mxu0 0
        %1185 = vmatpush2.bf16.msra.mxu0 0
        %1186 = vmatprep.subr.bf16.mxu0 0
        %1187 = vmatpush2.bf16.msra.mxu0 0
        %1188 = vmatprep.subr.bf16.mxu0 0
        %1189 = vmatpush2.bf16.msra.mxu0 0
        %1190 = vmatprep.subr.bf16.mxu0 0
        %1191 = vmatpush2.bf16.msra.mxu0 0
        %1192 = vmatprep.subr.bf16.mxu0 0
        %1193 = vmatpush2.bf16.msra.mxu0 0
        %1194 = vmatprep.subr.bf16.mxu0 0
        %1195 = vmatpush2.bf16.msra.mxu0 0
        %1196 = vmatprep.subr.bf16.mxu0 0
        %1197 = vmatpush2.bf16.msra.mxu0 0
        %1198 = vmatprep.subr.bf16.mxu0 0
        %1199 = vmatpush2.bf16.msra.mxu0 0
        %1200 = vmatprep.mubr.bf16.mxu0 0
        %1201 = vmatmul.mubr.bf16.gmra.mxu0 %v1163
        %v1202 = vpop.f32.mrf.mxu0
        %v1203 = vadd.f32 0.0, %v1202
        %v1204 = vpop.f32.mrf.mxu0
        %v1205 = vpop.f32.mrf.mxu0
        %v1206 = vpop.f32.mrf.mxu0
        %1207 = vdwg.mxu0
        %v1208 = vpack.c.bf16 %v1203, %v1203
        %s1209 = scalar_lea.vmem %s667, 8
        %v1210 = vld [vmem:[%s1209] sm:$0xf]
        %v1212 = vsel %vm780, %v1208, 0
        %v1215 = vsel %vm845, %v1210, 0
        %1217 = vmatprep.subr.bf16.mxu0 0
        %1218 = vmatpush1.bf16.msra.mxu0 0
        %1219 = vmatprep.subr.bf16.mxu0 0
        %1220 = vmatpush1.bf16.msra.mxu0 0
        %1221 = vmatprep.subr.bf16.mxu0 0
        %1222 = vmatpush1.bf16.msra.mxu0 0
        %1223 = vmatprep.subr.bf16.mxu0 0
        %1224 = vmatpush1.bf16.msra.mxu0 0
        %1225 = vmatprep.subr.bf16.mxu0 0
        %1226 = vmatpush1.bf16.msra.mxu0 0
        %1227 = vmatprep.subr.bf16.mxu0 0
        %1228 = vmatpush1.bf16.msra.mxu0 0
        %1229 = vmatprep.subr.bf16.mxu0 0
        %1230 = vmatpush1.bf16.msra.mxu0 0
        %1231 = vmatprep.subr.bf16.mxu0 0
        %1232 = vmatpush1.bf16.msra.mxu0 %v1215
        %1233 = vmatprep.subr.bf16.mxu0 0
        %1234 = vmatpush2.bf16.msra.mxu0 0
        %1235 = vmatprep.subr.bf16.mxu0 0
        %1236 = vmatpush2.bf16.msra.mxu0 0
        %1237 = vmatprep.subr.bf16.mxu0 0
        %1238 = vmatpush2.bf16.msra.mxu0 0
        %1239 = vmatprep.subr.bf16.mxu0 0
        %1240 = vmatpush2.bf16.msra.mxu0 0
        %1241 = vmatprep.subr.bf16.mxu0 0
        %1242 = vmatpush2.bf16.msra.mxu0 0
        %1243 = vmatprep.subr.bf16.mxu0 0
        %1244 = vmatpush2.bf16.msra.mxu0 0
        %1245 = vmatprep.subr.bf16.mxu0 0
        %1246 = vmatpush2.bf16.msra.mxu0 0
        %1247 = vmatprep.subr.bf16.mxu0 0
        %1248 = vmatpush2.bf16.msra.mxu0 0
        %1249 = vmatprep.mubr.bf16.mxu0 0
        %1250 = vmatmul.mubr.bf16.gmra.mxu0 %v1212
        %v1251 = vpop.f32.mrf.mxu0
        %v1252 = vadd.f32 0.0, %v1251
        %v1253 = vpop.f32.mrf.mxu0
        %v1254 = vpop.f32.mrf.mxu0
        %v1255 = vpop.f32.mrf.mxu0
        %1256 = vdwg.mxu0
        %v1257 = vadd.f32 %v1092, %v1252
        %1258 = vrot.lane.b32.xlu0 %v776, 104
        %v1259 = vpop.permute.xlu0 %1258
        %1260 = vrot.lane.b32.xlu0 %v776, 72
        %v1261 = vpop.permute.xlu0 %1260
        %v1263 = vsel %vm780, %v1259, 0
        %v1266 = vsel %vm780, %v1261, 0
        %1268 = vmatprep.subr.bf16.mxu0 0
        %1269 = vmatpush1.bf16.xpose.msra.mxu0 0
        %1270 = vmatprep.subr.bf16.mxu0 0
        %1271 = vmatpush1.bf16.xpose.msra.mxu0 0
        %1272 = vmatprep.subr.bf16.mxu0 0
        %1273 = vmatpush1.bf16.xpose.msra.mxu0 0
        %1274 = vmatprep.subr.bf16.mxu0 0
        %1275 = vmatpush1.bf16.xpose.msra.mxu0 0
        %1276 = vmatprep.subr.bf16.mxu0 0
        %1277 = vmatpush1.bf16.xpose.msra.mxu0 0
        %1278 = vmatprep.subr.bf16.mxu0 0
        %1279 = vmatpush1.bf16.xpose.msra.mxu0 0
        %1280 = vmatprep.subr.bf16.mxu0 0
        %1281 = vmatpush1.bf16.xpose.msra.mxu0 0
        %1282 = vmatprep.subr.bf16.mxu0 0
        %1283 = vmatpush1.bf16.xpose.msra.mxu0 %v1266
        %1284 = vmatprep.subr.bf16.mxu0 0
        %1285 = vmatpush2.bf16.xpose.msra.mxu0 0
        %1286 = vmatprep.subr.bf16.mxu0 0
        %1287 = vmatpush2.bf16.xpose.msra.mxu0 0
        %1288 = vmatprep.subr.bf16.mxu0 0
        %1289 = vmatpush2.bf16.xpose.msra.mxu0 0
        %1290 = vmatprep.subr.bf16.mxu0 0
        %1291 = vmatpush2.bf16.xpose.msra.mxu0 0
        %1292 = vmatprep.subr.bf16.mxu0 0
        %1293 = vmatpush2.bf16.xpose.msra.mxu0 0
        %1294 = vmatprep.subr.bf16.mxu0 0
        %1295 = vmatpush2.bf16.xpose.msra.mxu0 0
        %1296 = vmatprep.subr.bf16.mxu0 0
        %1297 = vmatpush2.bf16.xpose.msra.mxu0 0
        %1298 = vmatprep.subr.bf16.mxu0 0
        %1299 = vmatpush2.bf16.xpose.msra.mxu0 0
        %1300 = vmatprep.mubr.bf16.mxu0 0
        %1301 = vmatmul.mubr.bf16.gmra.mxu0 %v1263
        %v1302 = vpop.f32.mrf.mxu0
        %v1303 = vadd.f32 0.0, %v1302
        %v1304 = vpop.f32.mrf.mxu0
        %v1305 = vpop.f32.mrf.mxu0
        %v1306 = vpop.f32.mrf.mxu0
        %1307 = vdwg.mxu0
        %v1308 = vsel %vm780, %v1303, -inf
        %1309 = vmax.xlane.f32.xlu0 %v1308
        %v1310 = vpop.xlane.xlu0 %1309
        %v1311 = vsub.f32 %v1303, %v1310
        %v1312 = vmul.f32 %v1311, 1.442695
        %v1313 = vpow.pop %v1312
        %v1314 = vsel %vm780, %v1313, 0.0
        %1315 = vadd.xlane.f32.xlu0 %v1314
        %v1316 = vpop.xlane.xlu0 %1315
        %v1317 = vrcp.pop %v1316
        %v1318 = vmul.f32 %v1313, %v1317
        %v1319 = vadd.f32 %v1158, %v1318
        %v1320 = vpack.c.bf16 %v1318, %v1318
        %1321 = vrot.lane.b32.xlu0 %v776, 40
        %v1322 = vpop.permute.xlu0 %1321
        %v1324 = vsel %vm780, %v1320, 0
        %v1327 = vsel %vm845, %v1322, 0
        %1329 = vmatprep.subr.bf16.mxu0 0
        %1330 = vmatpush1.bf16.msra.mxu0 0
        %1331 = vmatprep.subr.bf16.mxu0 0
        %1332 = vmatpush1.bf16.msra.mxu0 0
        %1333 = vmatprep.subr.bf16.mxu0 0
        %1334 = vmatpush1.bf16.msra.mxu0 0
        %1335 = vmatprep.subr.bf16.mxu0 0
        %1336 = vmatpush1.bf16.msra.mxu0 0
        %1337 = vmatprep.subr.bf16.mxu0 0
        %1338 = vmatpush1.bf16.msra.mxu0 0
        %1339 = vmatprep.subr.bf16.mxu0 0
        %1340 = vmatpush1.bf16.msra.mxu0 0
        %1341 = vmatprep.subr.bf16.mxu0 0
        %1342 = vmatpush1.bf16.msra.mxu0 0
        %1343 = vmatprep.subr.bf16.mxu0 0
        %1344 = vmatpush1.bf16.msra.mxu0 %v1327
        %1345 = vmatprep.subr.bf16.mxu0 0
        %1346 = vmatpush2.bf16.msra.mxu0 0
        %1347 = vmatprep.subr.bf16.mxu0 0
        %1348 = vmatpush2.bf16.msra.mxu0 0
        %1349 = vmatprep.subr.bf16.mxu0 0
        %1350 = vmatpush2.bf16.msra.mxu0 0
        %1351 = vmatprep.subr.bf16.mxu0 0
        %1352 = vmatpush2.bf16.msra.mxu0 0
        %1353 = vmatprep.subr.bf16.mxu0 0
        %1354 = vmatpush2.bf16.msra.mxu0 0
        %1355 = vmatprep.subr.bf16.mxu0 0
        %1356 = vmatpush2.bf16.msra.mxu0 0
        %1357 = vmatprep.subr.bf16.mxu0 0
        %1358 = vmatpush2.bf16.msra.mxu0 0
        %1359 = vmatprep.subr.bf16.mxu0 0
        %1360 = vmatpush2.bf16.msra.mxu0 0
        %1361 = vmatprep.mubr.bf16.mxu0 0
        %1362 = vmatmul.mubr.bf16.gmra.mxu0 %v1324
        %v1363 = vpop.f32.mrf.mxu0
        %v1364 = vadd.f32 0.0, %v1363
        %v1365 = vpop.f32.mrf.mxu0
        %v1366 = vpop.f32.mrf.mxu0
        %v1367 = vpop.f32.mrf.mxu0
        %1368 = vdwg.mxu0
        %v1369 = vpack.c.bf16 %v1364, %v1364
        %s1370 = scalar_lea.vmem %s667, 12
        %v1371 = vld [vmem:[%s1370] sm:$0xf]
        %v1373 = vsel %vm780, %v1369, 0
        %v1376 = vsel %vm845, %v1371, 0
        %1378 = vmatprep.subr.bf16.mxu0 0
        %1379 = vmatpush1.bf16.msra.mxu0 0
        %1380 = vmatprep.subr.bf16.mxu0 0
        %1381 = vmatpush1.bf16.msra.mxu0 0
        %1382 = vmatprep.subr.bf16.mxu0 0
        %1383 = vmatpush1.bf16.msra.mxu0 0
        %1384 = vmatprep.subr.bf16.mxu0 0
        %1385 = vmatpush1.bf16.msra.mxu0 0
        %1386 = vmatprep.subr.bf16.mxu0 0
        %1387 = vmatpush1.bf16.msra.mxu0 0
        %1388 = vmatprep.subr.bf16.mxu0 0
        %1389 = vmatpush1.bf16.msra.mxu0 0
        %1390 = vmatprep.subr.bf16.mxu0 0
        %1391 = vmatpush1.bf16.msra.mxu0 0
        %1392 = vmatprep.subr.bf16.mxu0 0
        %1393 = vmatpush1.bf16.msra.mxu0 %v1376
        %1394 = vmatprep.subr.bf16.mxu0 0
        %1395 = vmatpush2.bf16.msra.mxu0 0
        %1396 = vmatprep.subr.bf16.mxu0 0
        %1397 = vmatpush2.bf16.msra.mxu0 0
        %1398 = vmatprep.subr.bf16.mxu0 0
        %1399 = vmatpush2.bf16.msra.mxu0 0
        %1400 = vmatprep.subr.bf16.mxu0 0
        %1401 = vmatpush2.bf16.msra.mxu0 0
        %1402 = vmatprep.subr.bf16.mxu0 0
        %1403 = vmatpush2.bf16.msra.mxu0 0
        %1404 = vmatprep.subr.bf16.mxu0 0
        %1405 = vmatpush2.bf16.msra.mxu0 0
        %1406 = vmatprep.subr.bf16.mxu0 0
        %1407 = vmatpush2.bf16.msra.mxu0 0
        %1408 = vmatprep.subr.bf16.mxu0 0
        %1409 = vmatpush2.bf16.msra.mxu0 0
        %1410 = vmatprep.mubr.bf16.mxu0 0
        %1411 = vmatmul.mubr.bf16.gmra.mxu0 %v1373
        %v1412 = vpop.f32.mrf.mxu0
        %v1413 = vadd.f32 0.0, %v1412
        %v1414 = vpop.f32.mrf.mxu0
        %v1415 = vpop.f32.mrf.mxu0
        %v1416 = vpop.f32.mrf.mxu0
        %1417 = vdwg.mxu0
        %v1418 = vadd.f32 %v1257, %v1413
        %v1419 = vmul.f32 %v1319, 0.25
        %v1420 = vmax.f32 %v1419, 1e-30
        %v1421 = vlog2.pop %v1420
        %v1422 = vmul.f32 %v1421, 0.6931472
        %vm1423 = vcmp.gt.f32.partialorder %v1419, 0.0
        %v1424 = vmul.f32 %v1419, %v1422
        %v1425 = vsel %vm1423, %v1424, 0.0
        %v1426 = vsel %vm780, %v1425, 0.0
        %1427 = vadd.xlane.f32.xlu0 %v1426
        %v1428 = vpop.xlane.xlu0 %1427
        %v1429 = vsub.f32 0.0, %v1428
        %v1431 = vlaneseq
        %v1432 = vand.u32 %v1431, 127
        %v1433 = vlaneseq
        %v1434 = vshrl.u32 %v1433, 7
        %v1435 = vsub.s32 %v1432, %v1434
        %v1436 = vrot.slane %v1429, %v1435
        %vm1438 = vcmask 57344
        %1439 = vst.msk [vmem:[%s654] sm:$0x1] %vm1438, %v1436
        %v1440 = vld [vmem:[%s670] sm:$0x1]
        %v1442 = vlaneseq
        %v1443 = vshrl.u32 %v1442, 7
        %v1444 = vsub.s32 0, %v1443
        %v1445 = vrot.slane %v1440, %v1444
        %v1447 = vadd.f32 %v1418, %v1445
        %v1448 = vadd.f32 %v707, %v1447
        %v1449 = vsel %vm732, %v1448, 0.0
        %1450 = vadd.xlane.f32.xlu0 %v1449
        %v1451 = vpop.xlane.xlu0 %1450
        %v1452 = vrcp.pop 32.0
        %v1453 = vmul.f32 %v1451, %v1452
        %v1454 = vsub.f32 %v1448, %v1453
        %v1455 = vmul.f32 %v1454, %v1454
        %v1456 = vsel %vm732, %v1455, 0.0
        %1457 = vadd.xlane.f32.xlu0 %v1456
        %v1458 = vpop.xlane.xlu0 %1457
        %v1459 = vmul.f32 %v1458, %v1452
        %v1460 = vadd.f32 %v1459, 1e-05
        %v1461 = vrsqrt.pop %v1460
        %v1462 = vmul.f32 %v1454, %v1461
        %v1463 = vld [vmem:[%s689] sm:$0x1]
        %v1465 = vlaneseq
        %v1466 = vshrl.u32 %v1465, 7
        %v1467 = vsub.s32 0, %v1466
        %v1468 = vrot.slane %v1463, %v1467
        %v1470 = vmul.f32 %v1462, %v1468
        %v1471 = vld [vmem:[%s692] sm:$0x1]
        %v1473 = vlaneseq
        %v1474 = vshrl.u32 %v1473, 7
        %v1475 = vsub.s32 0, %v1474
        %v1476 = vrot.slane %v1471, %v1475
        %v1478 = vadd.f32 %v1470, %v1476
        %v1479 = vpack.c.bf16 %v1478, %v1478
        %v1480 = vld [vmem:[%s675] sm:$0xf]
        %v1481 = vld [vmem:[%s675 + $0x4] sm:$0xf]
        %v1482 = vld [vmem:[%s675 + $0x8] sm:$0xf]
        %v1483 = vld [vmem:[%s675 + $0xc] sm:$0xf]
        %v1484 = vld [vmem:[%s678] sm:$0x1]
        %v1486 = vlaneseq
        %v1487 = vshrl.u32 %v1486, 7
        %v1488 = vsub.s32 0, %v1487
        %v1489 = vrot.slane %v1484, %v1488
        %v1495 = vunpack.c.l.b16 %v1480
        %v1496 = vunpack.c.l.b16 %v1481
        %v1497 = vunpack.c.l.b16 %v1482
        %v1498 = vunpack.c.l.b16 %v1483
        %v1499 = vpack.c.b16 %v1496, %v1495
        %v1500 = vpack.c.b16 %v1498, %v1497
        %v1504 = vsel %vm732, %v1479, 0
        %1506 = vmatprep.subr.bf16.mxu0 0
        %1507 = vmatpush1.bf16.msra.mxu0 0
        %1508 = vmatprep.subr.bf16.mxu0 0
        %1509 = vmatpush1.bf16.msra.mxu0 0
        %1510 = vmatprep.subr.bf16.mxu0 0
        %1511 = vmatpush1.bf16.msra.mxu0 0
        %1512 = vmatprep.subr.bf16.mxu0 0
        %1513 = vmatpush1.bf16.msra.mxu0 0
        %1514 = vmatprep.subr.bf16.mxu0 0
        %1515 = vmatpush1.bf16.msra.mxu0 0
        %1516 = vmatprep.subr.bf16.mxu0 0
        %1517 = vmatpush1.bf16.msra.mxu0 0
        %1518 = vmatprep.subr.bf16.mxu0 0
        %1519 = vmatpush1.bf16.msra.mxu0 %v1500
        %1520 = vmatprep.subr.bf16.mxu0 0
        %1521 = vmatpush1.bf16.msra.mxu0 %v1499
        %1522 = vmatprep.subr.bf16.mxu0 0
        %1523 = vmatpush2.bf16.msra.mxu0 0
        %1524 = vmatprep.subr.bf16.mxu0 0
        %1525 = vmatpush2.bf16.msra.mxu0 0
        %1526 = vmatprep.subr.bf16.mxu0 0
        %1527 = vmatpush2.bf16.msra.mxu0 0
        %1528 = vmatprep.subr.bf16.mxu0 0
        %1529 = vmatpush2.bf16.msra.mxu0 0
        %1530 = vmatprep.subr.bf16.mxu0 0
        %1531 = vmatpush2.bf16.msra.mxu0 0
        %1532 = vmatprep.subr.bf16.mxu0 0
        %1533 = vmatpush2.bf16.msra.mxu0 0
        %1534 = vmatprep.subr.bf16.mxu0 0
        %1535 = vmatpush2.bf16.msra.mxu0 0
        %1536 = vmatprep.subr.bf16.mxu0 0
        %1537 = vmatpush2.bf16.msra.mxu0 0
        %1538 = vmatprep.mubr.bf16.mxu0 0
        %1539 = vmatmul.mubr.bf16.gmra.mxu0 %v1504
        %v1540 = vpop.f32.mrf.mxu0
        %v1541 = vadd.f32 %v1489, %v1540
        %v1542 = vpop.f32.mrf.mxu0
        %v1543 = vpop.f32.mrf.mxu0
        %v1544 = vpop.f32.mrf.mxu0
        %1545 = vdwg.mxu0
        %v1546 = vmax.f32 %v1541, 0.0
        %v1547 = vpack.c.bf16 %v1546, %v1546
        %v1548 = vld [vmem:[%s683] sm:$0xf]
        %v1549 = vld [vmem:[%s683 + $0x4] sm:$0xf]
        %v1550 = vld [vmem:[%s683 + $0x8] sm:$0xf]
        %v1551 = vld [vmem:[%s683 + $0xc] sm:$0xf]
        %v1552 = vld [vmem:[%s683 + $0x10] sm:$0xf]
        %v1553 = vld [vmem:[%s683 + $0x14] sm:$0xf]
        %v1554 = vld [vmem:[%s683 + $0x18] sm:$0xf]
        %v1555 = vld [vmem:[%s683 + $0x1c] sm:$0xf]
        %v1556 = vld [vmem:[%s686] sm:$0x1]
        %v1558 = vlaneseq
        %v1559 = vshrl.u32 %v1558, 7
        %v1560 = vsub.s32 0, %v1559
        %v1561 = vrot.slane %v1556, %v1560
        %v1571 = vunpack.c.l.b16 %v1548
        %v1572 = vunpack.c.l.b16 %v1549
        %v1573 = vunpack.c.l.b16 %v1550
        %v1574 = vunpack.c.l.b16 %v1551
        %v1575 = vunpack.c.l.b16 %v1552
        %v1576 = vunpack.c.l.b16 %v1553
        %v1577 = vunpack.c.l.b16 %v1554
        %v1578 = vunpack.c.l.b16 %v1555
        %v1579 = vpack.c.b16 %v1572, %v1571
        %v1580 = vpack.c.b16 %v1574, %v1573
        %v1581 = vpack.c.b16 %v1576, %v1575
        %v1582 = vpack.c.b16 %v1578, %v1577
        %vm1587 = vcmask 523264
        %v1589 = vsel %vm1587, %v1547, 0
        %1591 = vmatprep.subr.bf16.mxu0 0
        %1592 = vmatpush1.bf16.msra.mxu0 0
        %1593 = vmatprep.subr.bf16.mxu0 0
        %1594 = vmatpush1.bf16.msra.mxu0 0
        %1595 = vmatprep.subr.bf16.mxu0 0
        %1596 = vmatpush1.bf16.msra.mxu0 0
        %1597 = vmatprep.subr.bf16.mxu0 0
        %1598 = vmatpush1.bf16.msra.mxu0 0
        %1599 = vmatprep.subr.bf16.mxu0 0
        %1600 = vmatpush1.bf16.msra.mxu0 %v1582
        %1601 = vmatprep.subr.bf16.mxu0 0
        %1602 = vmatpush1.bf16.msra.mxu0 %v1581
        %1603 = vmatprep.subr.bf16.mxu0 0
        %1604 = vmatpush1.bf16.msra.mxu0 %v1580
        %1605 = vmatprep.subr.bf16.mxu0 0
        %1606 = vmatpush1.bf16.msra.mxu0 %v1579
        %1607 = vmatprep.subr.bf16.mxu0 0
        %1608 = vmatpush2.bf16.msra.mxu0 0
        %1609 = vmatprep.subr.bf16.mxu0 0
        %1610 = vmatpush2.bf16.msra.mxu0 0
        %1611 = vmatprep.subr.bf16.mxu0 0
        %1612 = vmatpush2.bf16.msra.mxu0 0
        %1613 = vmatprep.subr.bf16.mxu0 0
        %1614 = vmatpush2.bf16.msra.mxu0 0
        %1615 = vmatprep.subr.bf16.mxu0 0
        %1616 = vmatpush2.bf16.msra.mxu0 0
        %1617 = vmatprep.subr.bf16.mxu0 0
        %1618 = vmatpush2.bf16.msra.mxu0 0
        %1619 = vmatprep.subr.bf16.mxu0 0
        %1620 = vmatpush2.bf16.msra.mxu0 0
        %1621 = vmatprep.subr.bf16.mxu0 0
        %1622 = vmatpush2.bf16.msra.mxu0 0
        %1623 = vmatprep.mubr.bf16.mxu0 0
        %1624 = vmatmul.mubr.bf16.gmra.mxu0 %v1589
        %v1625 = vpop.f32.mrf.mxu0
        %v1626 = vadd.f32 %v1561, %v1625
        %v1627 = vpop.f32.mrf.mxu0
        %v1628 = vpop.f32.mrf.mxu0
        %v1629 = vpop.f32.mrf.mxu0
        %1630 = vdwg.mxu0
        %v1631 = vadd.f32 %v1478, %v1626
        %v1632 = vsel %vm732, %v1631, 0.0
        %1633 = vadd.xlane.f32.xlu0 %v1632
        %v1634 = vpop.xlane.xlu0 %1633
        %v1635 = vmul.f32 %v1634, %v1452
        %v1636 = vsub.f32 %v1631, %v1635
        %v1637 = vmul.f32 %v1636, %v1636
        %v1638 = vsel %vm732, %v1637, 0.0
        %1639 = vadd.xlane.f32.xlu0 %v1638
        %v1640 = vpop.xlane.xlu0 %1639
        %v1641 = vmul.f32 %v1640, %v1452
        %v1642 = vadd.f32 %v1641, 1e-05
        %v1643 = vrsqrt.pop %v1642
        %v1644 = vmul.f32 %v1636, %v1643
        %v1645 = vld [vmem:[%s695] sm:$0x1]
        %v1647 = vlaneseq
        %v1648 = vshrl.u32 %v1647, 7
        %v1649 = vsub.s32 0, %v1648
        %v1650 = vrot.slane %v1645, %v1649
        %v1652 = vmul.f32 %v1644, %v1650
        %v1653 = vld [vmem:[%s698] sm:$0x1]
        %v1655 = vlaneseq
        %v1656 = vshrl.u32 %v1655, 7
        %v1657 = vsub.s32 0, %v1656
        %v1658 = vrot.slane %v1653, %v1657
        %v1660 = vadd.f32 %v1652, %v1658
        %1661 = vst.msk [vmem:[%s648] sm:$0xff] %vm732, %v1660
        %s1662 = sand.u32 %s393, 1
        %s1663 = scalar_lea.sflag [#allocation4], %s1662
        %s1664 = sand.u32 %s393, 1
        %s1665 = smul.addr %s1664, 8
        %s1666 = scalar_lea.vmem [#allocation5], %s1665
        %s1667 = sand.u32 %s421, 1
        %s1668 = scalar_lea.sflag [#allocation7], %s1667
        %s1669 = sand.u32 %s421, 1
        %s1670 = scalar_lea.vmem [#allocation6], %s1669
        // Predicated region
        $region81: #{tpu_custom_call.1} parent=71 // pred_check
          %p1671 = pneg %p403
        $region82: #{tpu_custom_call.1} parent=71 // pred_check_branch
          %1673 = sbr.rel (%p1671) target = $region84
        $region83: #{tpu_custom_call.1} parent=71 // pred_region
          %s1675 = ssub.s32 128, 128
          %1676 = vsyncadd %s1663, %s1675
          %s1677 = smul.addr %s39, 128
          %s1678 = scalar_lea.hbm %s13, %s1677
          %s1680 = sshll.u32 %s1666, 4
          %s1681 = int_to_ptr.vmem [resolvable:$true] %s1680
          %1683 = dma.vmem_to_hbm [thread:$0]  %s1681, 128, %s1678, %s1663
        $region84: #{tpu_custom_call.1} parent=71 // pred_fallthru
          _
        // Predicated region
        $region85: #{tpu_custom_call.1} parent=71 // pred_check
          %p1684 = pneg %p431
        $region86: #{tpu_custom_call.1} parent=71 // pred_check_branch
          %1686 = sbr.rel (%p1684) target = $region88
        $region87: #{tpu_custom_call.1} parent=71 // pred_region
          %s1688 = ssub.s32 16, 16
          %1689 = vsyncadd %s1668, %s1688
          %s1690 = smul.addr %s40, 2
          %s1691 = sadd.s32 %s39, %s1690
          %s1692 = smul.addr %s1691, 16
          %s1693 = scalar_lea.hbm %s14, %s1692
          %s1695 = sshll.u32 %s1670, 4
          %s1696 = int_to_ptr.vmem [resolvable:$true] %s1695
          %1698 = dma.vmem_to_hbm [thread:$0]  %s1696, 16, %s1693, %s1668
        $region88: #{tpu_custom_call.1} parent=71 // pred_fallthru
          _
      $region72: #{tpu_custom_call.1} parent=5 // pred_fallthru
        _
      %p1699 = scmp.le.s32.totalorder 2, %s30
      // Predicated region
      $region89: #{tpu_custom_call.1} parent=5 // pred_check
        %p1700 = pneg %p1699
      $region90: #{tpu_custom_call.1} parent=5 // pred_check_branch
        %1702 = sbr.rel (%p1700) target = $region92
      $region91: #{tpu_custom_call.1} parent=5 // pred_region
        %s1703 = ssub.s32 %s30, 2
        // Predicated region
        $region93: #{tpu_custom_call.1} parent=91 // pred_check
          %p1704 = pneg %p409
        $region94: #{tpu_custom_call.1} parent=91 // pred_check_branch
          %1706 = sbr.rel (%p1704) target = $region96
        $region95: #{tpu_custom_call.1} parent=91 // pred_region
          %s1707 = sand.u32 %s394, 1
          %s1708 = scalar_lea.sflag [#allocation4], %s1707
          %s1709 = sand.u32 %s394, 1
          %s1710 = smul.addr %s1709, 8
          %s1711 = scalar_lea.vmem [#allocation5], %s1710
          %1712 = dma.done %s1708, 128
        $region96: #{tpu_custom_call.1} parent=91 // pred_fallthru
          _
        // Predicated region
        $region97: #{tpu_custom_call.1} parent=91 // pred_check
          %p1713 = pneg %p437
        $region98: #{tpu_custom_call.1} parent=91 // pred_check_branch
          %1715 = sbr.rel (%p1713) target = $region100
        $region99: #{tpu_custom_call.1} parent=91 // pred_region
          %s1716 = sand.u32 %s422, 1
          %s1717 = scalar_lea.sflag [#allocation7], %s1716
          %s1718 = sand.u32 %s422, 1
          %s1719 = scalar_lea.vmem [#allocation6], %s1718
          %1720 = dma.done %s1717, 16
        $region100: #{tpu_custom_call.1} parent=91 // pred_fallthru
          _
      $region92: #{tpu_custom_call.1} parent=5 // pred_fallthru
        _
    $region6: #{tpu_custom_call.1} parent=1 // loop_footer
      %s34 = sadd.s32 1, %s30
    $region7: #{tpu_custom_call.1} parent=1 // loop_footer_branch
      %29 = sbr.rel target = $region3
    $region8: #{tpu_custom_call.1} parent=1 // loop_exit
      _
    %1721 = vsyncpa [#allocation3], 1
    %s1722 = scalar_lea.sflag [#allocation3], 1
    %1723 = vsyncpa %s1722, 1
    %1724 = vsyncpa [#allocation4], 1
    %s1725 = scalar_lea.sflag [#allocation4], 1
    %1726 = vsyncpa %s1725, 1
    %1727 = vsyncpa [#allocation7], 1
    %s1728 = scalar_lea.sflag [#allocation7], 1
    %1729 = vsyncpa %s1728, 1

</llo_original>
